<compile_context>
chip_gen: v5e
topology: v5e:2x2
jax: 0.10.0
libtpu: 0.0.40
codegen_flags: <defaults>
</compile_context>

<pallas_src>
import functools

import jax
import jax.numpy as jnp
from jax.experimental import pallas as pl
from jax.experimental.pallas import tpu as pltpu

INPUT_SIZE = 32    # Constants.LSTM_DEFAULT_INPUT_SIZE
HIDDEN_SIZE = 32   # Constants.LSTM_HIDDEN_SIZE (== INPUT_SIZE so stacked layers are uniform)
NUM_LAYERS = 2     # Constants.LSTM_NUM_LAYERS
OUTPUT_SIZE = 1    # Constants.LINEAR_LAYER
OUT_LANES = 128    # lane-dense output slab width


def _lstm_head_kernel(x_ref, w_ih_ref, w_hh_ref, b_ref, wlin_ref, blin_ref,
                      out_ref, hseq_ref, *, seq_len, num_layers, batch, hidden):
    """Multi-layer LSTM over the VMEM-resident sequence + fused Linear head.

    x_ref:     (T*B, I)    time-major flattened input, bf16
    w_ih_ref:  (L, I, 4H)  input-projection weights (PyTorch gate order i,f,g,o), bf16
    w_hh_ref:  (L, H, 4H)  recurrent weights, bf16
    b_ref:     (L, 1, 4H)  b_ih + b_hh per layer, f32
    wlin_ref:  (1, H)      linear head weights, f32
    blin_ref:  (1, 1)      linear head bias, f32
    out_ref:   (B, 128)    lane-broadcast output slab (column 0 is the result)
    hseq_ref:  (T*B, H)    VMEM scratch: hidden sequence of the previous layer
    """
    four_h = 4 * hidden

    # ---- hoisted loop invariants -------------------------------------------
    lane = jax.lax.broadcasted_iota(jnp.int32, (batch, four_h), 1)
    g_lanes = (lane >= 2 * hidden) & (lane < 3 * hidden)      # tanh ("g") gate lanes
    pre_scale = jnp.where(g_lanes, 1.0, 0.5).astype(jnp.float32)

    h_last = None
    for l in range(num_layers):                               # static layer loop
        # Batched input projection for the whole sequence: (T*B, H) @ (H, 4H).
        if l == 0:
            inp_b = x_ref[...]                                # already bf16
        else:
            inp_b = hseq_ref[...].astype(jnp.bfloat16)
        gx = jnp.dot(inp_b, w_ih_ref[l],
                     preferred_element_type=jnp.float32) + b_ref[l]   # (T*B, 4H) f32

        whh = w_hh_ref[l]                                     # (H, 4H) bf16, loaded once
        h = jnp.zeros((batch, hidden), jnp.float32)
        c = jnp.zeros((batch, hidden), jnp.float32)

        for t in range(seq_len):                              # static unroll (T small)
            # Recurrent matmul only (K = H); input projection is a sublane-
            # aligned row slice of the precomputed gx.
            gates = gx[t * batch:(t + 1) * batch, :] + jnp.dot(
                h.astype(jnp.bfloat16), whh, preferred_element_type=jnp.float32)

            # Single tanh EUP pass: sigmoid(x) = 0.5 * (1 + tanh(x/2)).
            th = jnp.tanh(gates * pre_scale)
            act = jnp.where(g_lanes, th, 0.5 * th + 0.5)

            i_g = act[:, 0 * hidden:1 * hidden]
            f_g = act[:, 1 * hidden:2 * hidden]
            g_g = act[:, 2 * hidden:3 * hidden]
            o_g = act[:, 3 * hidden:4 * hidden]
            c = f_g * c + i_g * g_g
            h = o_g * jnp.tanh(c)

            if l < num_layers - 1:                            # feed next layer
                hseq_ref[t * batch:(t + 1) * batch, :] = h
        h_last = h

    # ---- fused Linear head: (B,H) * (1,H) -> lane reduce -> + bias ----------
    val = jnp.sum(h_last * wlin_ref[...], axis=-1, keepdims=True) + blin_ref[...]
    out_ref[...] = jnp.broadcast_to(val, out_ref.shape)       # lane-dense full store


@jax.jit
def value_predictor_forward(x, params):
    """x: (B, T, I) float32 (batch-first, as in PyTorch) -> (B,) float32."""
    w_ih, w_hh, b, wlin, blin = params
    B, T, I = x.shape
    L, h_in, four_h = w_ih.shape
    H = four_h // 4
    # Stacked-weight layout assumes input_size == hidden_size for layers > 0.
    assert I == H and h_in == H, "kernel assumes input_size == hidden_size"

    # Genuine time-major transpose (NOT a bare reshape) + flatten + bf16 cast.
    # Tiny (~8 KiB) array; the transpose/convert fuse into one XLA op.
    x_tm = jnp.transpose(x, (1, 0, 2)).reshape(T * B, I).astype(jnp.bfloat16)

    kernel = functools.partial(_lstm_head_kernel, seq_len=T, num_layers=L,
                               batch=B, hidden=H)

    out_slab = pl.pallas_call(
        kernel,
        out_shape=jax.ShapeDtypeStruct((B, OUT_LANES), jnp.float32),
        in_specs=[
            pl.BlockSpec(memory_space=pltpu.MemorySpace.VMEM),  # x      (T*B, I)  bf16
            pl.BlockSpec(memory_space=pltpu.MemorySpace.VMEM),  # W_ih   (L, I, 4H) bf16
            pl.BlockSpec(memory_space=pltpu.MemorySpace.VMEM),  # W_hh   (L, H, 4H) bf16
            pl.BlockSpec(memory_space=pltpu.MemorySpace.VMEM),  # b      (L, 1, 4H) f32
            pl.BlockSpec(memory_space=pltpu.MemorySpace.VMEM),  # wlin   (1, H)     f32
            pl.BlockSpec(memory_space=pltpu.MemorySpace.VMEM),  # blin   (1, 1)     f32
        ],
        out_specs=pl.BlockSpec(memory_space=pltpu.MemorySpace.VMEM),
        scratch_shapes=[pltpu.VMEM((T * B, H), jnp.float32)],   # inter-layer hidden seq
    )(x_tm, w_ih, w_hh, b, wlin, blin)

    return out_slab[:, 0]


def init_params(key, input_size, hidden, num_layers, output_size):
    """Deterministic PyTorch-style U(-1/sqrt(H), 1/sqrt(H)) init, pre-laid-out for the kernel."""
    assert input_size == hidden, "weight layout assumes input_size == hidden_size"
    del output_size  # fixed to 1 by the head layout below
    k = 1.0 / jnp.sqrt(jnp.float32(hidden))
    keys = jax.random.split(key, 6)
    w_ih = jax.random.uniform(keys[0], (num_layers, input_size, 4 * hidden),
                              jnp.float32, -k, k)              # W_ih^T per layer
    w_hh = jax.random.uniform(keys[1], (num_layers, hidden, 4 * hidden),
                              jnp.float32, -k, k)              # W_hh^T per layer
    b_ih = jax.random.uniform(keys[2], (num_layers, 1, 4 * hidden), jnp.float32, -k, k)
    b_hh = jax.random.uniform(keys[3], (num_layers, 1, 4 * hidden), jnp.float32, -k, k)
    wlin = jax.random.uniform(keys[4], (1, hidden), jnp.float32, -k, k)
    blin = jax.random.uniform(keys[5], (1, 1), jnp.float32, -k, k)
    # MXU operands stored bf16 (single-pass MXU, f32 accumulation); rest stays f32.
    return (w_ih.astype(jnp.bfloat16), w_hh.astype(jnp.bfloat16),
            b_ih + b_hh, wlin, blin)


def reference_forward(x, params):
    """Pure-JAX reference (lax.scan LSTM, f32 math) for sanity checking."""
    w_ih, w_hh, b, wlin, blin = params
    w_ih = w_ih.astype(jnp.float32)
    w_hh = w_hh.astype(jnp.float32)
    B, T, _ = x.shape
    L, _, four_h = w_ih.shape
    H = four_h // 4
    inp = jnp.transpose(x, (1, 0, 2))  # (T, B, I)
    h_last = None
    for l in range(L):
        def step(carry, xt, l=l):
            h, c = carry
            gates = xt @ w_ih[l] + h @ w_hh[l] + b[l]
            i = jax.nn.sigmoid(gates[:, :H])
            f = jax.nn.sigmoid(gates[:, H:2 * H])
            g = jnp.tanh(gates[:, 2 * H:3 * H])
            o = jax.nn.sigmoid(gates[:, 3 * H:])
            c = f * c + i * g
            h = o * jnp.tanh(c)
            return (h, c), h
        (h_last, _), hs = jax.lax.scan(
            step,
            (jnp.zeros((B, H), jnp.float32), jnp.zeros((B, H), jnp.float32)),
            inp)
        inp = hs
    return (h_last * wlin).sum(-1) + blin[0, 0]


if __name__ == "__main__":
    # TODO(synk): .to(device) / requires_grad_ from the PyTorch module are runtime /
    # autograd concerns with no kernel equivalent; forward math only is implemented.
    B, T = 8, 8
    key = jax.random.PRNGKey(0)
    kx, kp = jax.random.split(key)
    x = jax.random.normal(kx, (B, T, INPUT_SIZE), jnp.float32)
    params = init_params(kp, INPUT_SIZE, HIDDEN_SIZE, NUM_LAYERS, OUTPUT_SIZE)

    out = jax.block_until_ready(value_predictor_forward(x, params))
    ref = jax.block_until_ready(reference_forward(x, params))

    assert out.shape == (B,), out.shape
    # Tolerance covers bf16 MXU operands (f32 accumulation, f32 activations).
    assert jnp.allclose(out, ref, atol=2e-2, rtol=2e-2), (out, ref)

    print("KERNEL_OK")
</pallas_src>

<mosaic_0001>
module attributes {stable_mosaic.version = 11 : i64} {
  func.func @_lstm_head_kernel(%arg0: memref<64x32xbf16, #tpu.memory_space<vmem>>, %arg1: memref<2x32x128xbf16, #tpu.memory_space<vmem>>, %arg2: memref<2x32x128xbf16, #tpu.memory_space<vmem>>, %arg3: memref<2x1x128xf32, #tpu.memory_space<vmem>>, %arg4: memref<1x32xf32, #tpu.memory_space<vmem>>, %arg5: memref<1x1xf32, #tpu.memory_space<vmem>>, %arg6: memref<8x128xf32, #tpu.memory_space<vmem>>, %arg7: memref<64x32xf32, #tpu.memory_space<vmem>>) attributes {dimension_semantics = [], scalar_prefetch = 0 : i64, scratch_operands = 1 : i64, tpu.core_type = #tpu.core_type<tc>} {
    %0 = tpu.iota {dimensions = array<i32: 1>} : vector<8x128xi32>
    %c64_i32 = arith.constant 64 : i32
    %1 = vector.broadcast %c64_i32 : i32 to vector<8x128xi32>
    %2 = arith.cmpi sge, %0, %1 : vector<8x128xi32>
    %c96_i32 = arith.constant 96 : i32
    %3 = vector.broadcast %c96_i32 : i32 to vector<8x128xi32>
    %4 = arith.cmpi slt, %0, %3 : vector<8x128xi32>
    %5 = arith.andi %2, %4 : vector<8x128xi1>
    %cst = arith.constant 1.000000e+00 : f32
    %cst_0 = arith.constant 5.000000e-01 : f32
    %6 = vector.broadcast %cst : f32 to vector<8x128xf32>
    %7 = vector.broadcast %cst_0 : f32 to vector<8x128xf32>
    %8 = arith.select %5, %6, %7 : vector<8x128xi1>, vector<8x128xf32>
    %c0 = arith.constant 0 : index
    %c0_1 = arith.constant 0 : index
    %9 = vector.load %arg0[%c0, %c0_1] : memref<64x32xbf16, #tpu.memory_space<vmem>>, vector<64x32xbf16>
    %c0_2 = arith.constant 0 : index
    %c0_3 = arith.constant 0 : index
    %c0_4 = arith.constant 0 : index
    %10 = vector.load %arg1[%c0_2, %c0_3, %c0_4] : memref<2x32x128xbf16, #tpu.memory_space<vmem>>, vector<1x32x128xbf16>
    %11 = vector.shape_cast %10 : vector<1x32x128xbf16> to vector<32x128xbf16>
    %cst_5 = arith.constant dense<0.000000e+00> : vector<64x128xf32>
    %12 = tpu.matmul %9, %11, %cst_5 {dimension_numbers = #tpu.dot_dimension_numbers<[1], [0], [0], [1], [0, 0, 1, 1], [], []>} : vector<64x32xbf16>, vector<32x128xbf16>, vector<64x128xf32> -> vector<64x128xf32>
    %c0_6 = arith.constant 0 : index
    %c0_7 = arith.constant 0 : index
    %c0_8 = arith.constant 0 : index
    %13 = vector.load %arg3[%c0_6, %c0_7, %c0_8] : memref<2x1x128xf32, #tpu.memory_space<vmem>>, vector<1x1x128xf32>
    %14 = vector.shape_cast %13 : vector<1x1x128xf32> to vector<1x128xf32>
    %15 = vector.broadcast %14 : vector<1x128xf32> to vector<64x128xf32>
    %16 = arith.addf %12, %15 : vector<64x128xf32>
    %c0_9 = arith.constant 0 : index
    %c0_10 = arith.constant 0 : index
    %c0_11 = arith.constant 0 : index
    %17 = vector.load %arg2[%c0_9, %c0_10, %c0_11] : memref<2x32x128xbf16, #tpu.memory_space<vmem>>, vector<1x32x128xbf16>
    %18 = vector.shape_cast %17 : vector<1x32x128xbf16> to vector<32x128xbf16>
    %cst_12 = arith.constant 0.000000e+00 : f32
    %19 = vector.broadcast %cst_12 : f32 to vector<8x32xf32>
    %cst_13 = arith.constant 0.000000e+00 : f32
    %20 = vector.broadcast %cst_13 : f32 to vector<8x32xf32>
    %21 = vector.extract_strided_slice %16 {offsets = [0, 0], sizes = [8, 128], strides = [1, 1]} : vector<64x128xf32> to vector<8x128xf32>
    %22 = arith.truncf %19 : vector<8x32xf32> to vector<8x32xbf16>
    %cst_14 = arith.constant dense<0.000000e+00> : vector<8x128xf32>
    %23 = tpu.matmul %22, %18, %cst_14 {dimension_numbers = #tpu.dot_dimension_numbers<[1], [0], [0], [1], [0, 0, 1, 1], [], []>} : vector<8x32xbf16>, vector<32x128xbf16>, vector<8x128xf32> -> vector<8x128xf32>
    %24 = arith.addf %21, %23 : vector<8x128xf32>
    %25 = arith.mulf %24, %8 : vector<8x128xf32>
    %26 = math.tanh %25 : vector<8x128xf32>
    %cst_15 = arith.constant 5.000000e-01 : f32
    %27 = vector.broadcast %cst_15 : f32 to vector<8x128xf32>
    %28 = arith.mulf %27, %26 : vector<8x128xf32>
    %cst_16 = arith.constant 5.000000e-01 : f32
    %29 = vector.broadcast %cst_16 : f32 to vector<8x128xf32>
    %30 = arith.addf %28, %29 : vector<8x128xf32>
    %31 = arith.select %5, %26, %30 : vector<8x128xi1>, vector<8x128xf32>
    %32 = vector.extract_strided_slice %31 {offsets = [0, 0], sizes = [8, 32], strides = [1, 1]} : vector<8x128xf32> to vector<8x32xf32>
    %33 = vector.extract_strided_slice %31 {offsets = [0, 32], sizes = [8, 32], strides = [1, 1]} : vector<8x128xf32> to vector<8x32xf32>
    %34 = vector.extract_strided_slice %31 {offsets = [0, 64], sizes = [8, 32], strides = [1, 1]} : vector<8x128xf32> to vector<8x32xf32>
    %35 = vector.extract_strided_slice %31 {offsets = [0, 96], sizes = [8, 32], strides = [1, 1]} : vector<8x128xf32> to vector<8x32xf32>
    %36 = arith.mulf %33, %20 : vector<8x32xf32>
    %37 = arith.mulf %32, %34 : vector<8x32xf32>
    %38 = arith.addf %36, %37 : vector<8x32xf32>
    %39 = math.tanh %38 : vector<8x32xf32>
    %40 = arith.mulf %35, %39 : vector<8x32xf32>
    %c0_17 = arith.constant 0 : index
    %c0_18 = arith.constant 0 : index
    %41 = vector.load %arg7[%c0_17, %c0_18] : memref<64x32xf32, #tpu.memory_space<vmem>>, vector<8x32xf32>
    tpu.vector_store %arg7[%c0_17, %c0_18], %40 {strides = array<i32>} : memref<64x32xf32, #tpu.memory_space<vmem>>, vector<8x32xf32>,
    %42 = vector.extract_strided_slice %16 {offsets = [8, 0], sizes = [8, 128], strides = [1, 1]} : vector<64x128xf32> to vector<8x128xf32>
    %43 = arith.truncf %40 : vector<8x32xf32> to vector<8x32xbf16>
    %cst_19 = arith.constant dense<0.000000e+00> : vector<8x128xf32>
    %44 = tpu.matmul %43, %18, %cst_19 {dimension_numbers = #tpu.dot_dimension_numbers<[1], [0], [0], [1], [0, 0, 1, 1], [], []>} : vector<8x32xbf16>, vector<32x128xbf16>, vector<8x128xf32> -> vector<8x128xf32>
    %45 = arith.addf %42, %44 : vector<8x128xf32>
    %46 = arith.mulf %45, %8 : vector<8x128xf32>
    %47 = math.tanh %46 : vector<8x128xf32>
    %cst_20 = arith.constant 5.000000e-01 : f32
    %48 = vector.broadcast %cst_20 : f32 to vector<8x128xf32>
    %49 = arith.mulf %48, %47 : vector<8x128xf32>
    %cst_21 = arith.constant 5.000000e-01 : f32
    %50 = vector.broadcast %cst_21 : f32 to vector<8x128xf32>
    %51 = arith.addf %49, %50 : vector<8x128xf32>
    %52 = arith.select %5, %47, %51 : vector<8x128xi1>, vector<8x128xf32>
    %53 = vector.extract_strided_slice %52 {offsets = [0, 0], sizes = [8, 32], strides = [1, 1]} : vector<8x128xf32> to vector<8x32xf32>
    %54 = vector.extract_strided_slice %52 {offsets = [0, 32], sizes = [8, 32], strides = [1, 1]} : vector<8x128xf32> to vector<8x32xf32>
    %55 = vector.extract_strided_slice %52 {offsets = [0, 64], sizes = [8, 32], strides = [1, 1]} : vector<8x128xf32> to vector<8x32xf32>
    %56 = vector.extract_strided_slice %52 {offsets = [0, 96], sizes = [8, 32], strides = [1, 1]} : vector<8x128xf32> to vector<8x32xf32>
    %57 = arith.mulf %54, %38 : vector<8x32xf32>
    %58 = arith.mulf %53, %55 : vector<8x32xf32>
    %59 = arith.addf %57, %58 : vector<8x32xf32>
    %60 = math.tanh %59 : vector<8x32xf32>
    %61 = arith.mulf %56, %60 : vector<8x32xf32>
    %c8 = arith.constant 8 : index
    %c0_22 = arith.constant 0 : index
    %62 = vector.load %arg7[%c8, %c0_22] : memref<64x32xf32, #tpu.memory_space<vmem>>, vector<8x32xf32>
    tpu.vector_store %arg7[%c8, %c0_22], %61 {strides = array<i32>} : memref<64x32xf32, #tpu.memory_space<vmem>>, vector<8x32xf32>,
    %63 = vector.extract_strided_slice %16 {offsets = [16, 0], sizes = [8, 128], strides = [1, 1]} : vector<64x128xf32> to vector<8x128xf32>
    %64 = arith.truncf %61 : vector<8x32xf32> to vector<8x32xbf16>
    %cst_23 = arith.constant dense<0.000000e+00> : vector<8x128xf32>
    %65 = tpu.matmul %64, %18, %cst_23 {dimension_numbers = #tpu.dot_dimension_numbers<[1], [0], [0], [1], [0, 0, 1, 1], [], []>} : vector<8x32xbf16>, vector<32x128xbf16>, vector<8x128xf32> -> vector<8x128xf32>
    %66 = arith.addf %63, %65 : vector<8x128xf32>
    %67 = arith.mulf %66, %8 : vector<8x128xf32>
    %68 = math.tanh %67 : vector<8x128xf32>
    %cst_24 = arith.constant 5.000000e-01 : f32
    %69 = vector.broadcast %cst_24 : f32 to vector<8x128xf32>
    %70 = arith.mulf %69, %68 : vector<8x128xf32>
    %cst_25 = arith.constant 5.000000e-01 : f32
    %71 = vector.broadcast %cst_25 : f32 to vector<8x128xf32>
    %72 = arith.addf %70, %71 : vector<8x128xf32>
    %73 = arith.select %5, %68, %72 : vector<8x128xi1>, vector<8x128xf32>
    %74 = vector.extract_strided_slice %73 {offsets = [0, 0], sizes = [8, 32], strides = [1, 1]} : vector<8x128xf32> to vector<8x32xf32>
    %75 = vector.extract_strided_slice %73 {offsets = [0, 32], sizes = [8, 32], strides = [1, 1]} : vector<8x128xf32> to vector<8x32xf32>
    %76 = vector.extract_strided_slice %73 {offsets = [0, 64], sizes = [8, 32], strides = [1, 1]} : vector<8x128xf32> to vector<8x32xf32>
    %77 = vector.extract_strided_slice %73 {offsets = [0, 96], sizes = [8, 32], strides = [1, 1]} : vector<8x128xf32> to vector<8x32xf32>
    %78 = arith.mulf %75, %59 : vector<8x32xf32>
    %79 = arith.mulf %74, %76 : vector<8x32xf32>
    %80 = arith.addf %78, %79 : vector<8x32xf32>
    %81 = math.tanh %80 : vector<8x32xf32>
    %82 = arith.mulf %77, %81 : vector<8x32xf32>
    %c16 = arith.constant 16 : index
    %c0_26 = arith.constant 0 : index
    %83 = vector.load %arg7[%c16, %c0_26] : memref<64x32xf32, #tpu.memory_space<vmem>>, vector<8x32xf32>
    tpu.vector_store %arg7[%c16, %c0_26], %82 {strides = array<i32>} : memref<64x32xf32, #tpu.memory_space<vmem>>, vector<8x32xf32>,
    %84 = vector.extract_strided_slice %16 {offsets = [24, 0], sizes = [8, 128], strides = [1, 1]} : vector<64x128xf32> to vector<8x128xf32>
    %85 = arith.truncf %82 : vector<8x32xf32> to vector<8x32xbf16>
    %cst_27 = arith.constant dense<0.000000e+00> : vector<8x128xf32>
    %86 = tpu.matmul %85, %18, %cst_27 {dimension_numbers = #tpu.dot_dimension_numbers<[1], [0], [0], [1], [0, 0, 1, 1], [], []>} : vector<8x32xbf16>, vector<32x128xbf16>, vector<8x128xf32> -> vector<8x128xf32>
    %87 = arith.addf %84, %86 : vector<8x128xf32>
    %88 = arith.mulf %87, %8 : vector<8x128xf32>
    %89 = math.tanh %88 : vector<8x128xf32>
    %cst_28 = arith.constant 5.000000e-01 : f32
    %90 = vector.broadcast %cst_28 : f32 to vector<8x128xf32>
    %91 = arith.mulf %90, %89 : vector<8x128xf32>
    %cst_29 = arith.constant 5.000000e-01 : f32
    %92 = vector.broadcast %cst_29 : f32 to vector<8x128xf32>
    %93 = arith.addf %91, %92 : vector<8x128xf32>
    %94 = arith.select %5, %89, %93 : vector<8x128xi1>, vector<8x128xf32>
    %95 = vector.extract_strided_slice %94 {offsets = [0, 0], sizes = [8, 32], strides = [1, 1]} : vector<8x128xf32> to vector<8x32xf32>
    %96 = vector.extract_strided_slice %94 {offsets = [0, 32], sizes = [8, 32], strides = [1, 1]} : vector<8x128xf32> to vector<8x32xf32>
    %97 = vector.extract_strided_slice %94 {offsets = [0, 64], sizes = [8, 32], strides = [1, 1]} : vector<8x128xf32> to vector<8x32xf32>
    %98 = vector.extract_strided_slice %94 {offsets = [0, 96], sizes = [8, 32], strides = [1, 1]} : vector<8x128xf32> to vector<8x32xf32>
    %99 = arith.mulf %96, %80 : vector<8x32xf32>
    %100 = arith.mulf %95, %97 : vector<8x32xf32>
    %101 = arith.addf %99, %100 : vector<8x32xf32>
    %102 = math.tanh %101 : vector<8x32xf32>
    %103 = arith.mulf %98, %102 : vector<8x32xf32>
    %c24 = arith.constant 24 : index
    %c0_30 = arith.constant 0 : index
    %104 = vector.load %arg7[%c24, %c0_30] : memref<64x32xf32, #tpu.memory_space<vmem>>, vector<8x32xf32>
    tpu.vector_store %arg7[%c24, %c0_30], %103 {strides = array<i32>} : memref<64x32xf32, #tpu.memory_space<vmem>>, vector<8x32xf32>,
    %105 = vector.extract_strided_slice %16 {offsets = [32, 0], sizes = [8, 128], strides = [1, 1]} : vector<64x128xf32> to vector<8x128xf32>
    %106 = arith.truncf %103 : vector<8x32xf32> to vector<8x32xbf16>
    %cst_31 = arith.constant dense<0.000000e+00> : vector<8x128xf32>
    %107 = tpu.matmul %106, %18, %cst_31 {dimension_numbers = #tpu.dot_dimension_numbers<[1], [0], [0], [1], [0, 0, 1, 1], [], []>} : vector<8x32xbf16>, vector<32x128xbf16>, vector<8x128xf32> -> vector<8x128xf32>
    %108 = arith.addf %105, %107 : vector<8x128xf32>
    %109 = arith.mulf %108, %8 : vector<8x128xf32>
    %110 = math.tanh %109 : vector<8x128xf32>
    %cst_32 = arith.constant 5.000000e-01 : f32
    %111 = vector.broadcast %cst_32 : f32 to vector<8x128xf32>
    %112 = arith.mulf %111, %110 : vector<8x128xf32>
    %cst_33 = arith.constant 5.000000e-01 : f32
    %113 = vector.broadcast %cst_33 : f32 to vector<8x128xf32>
    %114 = arith.addf %112, %113 : vector<8x128xf32>
    %115 = arith.select %5, %110, %114 : vector<8x128xi1>, vector<8x128xf32>
    %116 = vector.extract_strided_slice %115 {offsets = [0, 0], sizes = [8, 32], strides = [1, 1]} : vector<8x128xf32> to vector<8x32xf32>
    %117 = vector.extract_strided_slice %115 {offsets = [0, 32], sizes = [8, 32], strides = [1, 1]} : vector<8x128xf32> to vector<8x32xf32>
    %118 = vector.extract_strided_slice %115 {offsets = [0, 64], sizes = [8, 32], strides = [1, 1]} : vector<8x128xf32> to vector<8x32xf32>
    %119 = vector.extract_strided_slice %115 {offsets = [0, 96], sizes = [8, 32], strides = [1, 1]} : vector<8x128xf32> to vector<8x32xf32>
    %120 = arith.mulf %117, %101 : vector<8x32xf32>
    %121 = arith.mulf %116, %118 : vector<8x32xf32>
    %122 = arith.addf %120, %121 : vector<8x32xf32>
    %123 = math.tanh %122 : vector<8x32xf32>
    %124 = arith.mulf %119, %123 : vector<8x32xf32>
    %c32 = arith.constant 32 : index
    %c0_34 = arith.constant 0 : index
    %125 = vector.load %arg7[%c32, %c0_34] : memref<64x32xf32, #tpu.memory_space<vmem>>, vector<8x32xf32>
    tpu.vector_store %arg7[%c32, %c0_34], %124 {strides = array<i32>} : memref<64x32xf32, #tpu.memory_space<vmem>>, vector<8x32xf32>,
    %126 = vector.extract_strided_slice %16 {offsets = [40, 0], sizes = [8, 128], strides = [1, 1]} : vector<64x128xf32> to vector<8x128xf32>
    %127 = arith.truncf %124 : vector<8x32xf32> to vector<8x32xbf16>
    %cst_35 = arith.constant dense<0.000000e+00> : vector<8x128xf32>
    %128 = tpu.matmul %127, %18, %cst_35 {dimension_numbers = #tpu.dot_dimension_numbers<[1], [0], [0], [1], [0, 0, 1, 1], [], []>} : vector<8x32xbf16>, vector<32x128xbf16>, vector<8x128xf32> -> vector<8x128xf32>
    %129 = arith.addf %126, %128 : vector<8x128xf32>
    %130 = arith.mulf %129, %8 : vector<8x128xf32>
    %131 = math.tanh %130 : vector<8x128xf32>
    %cst_36 = arith.constant 5.000000e-01 : f32
    %132 = vector.broadcast %cst_36 : f32 to vector<8x128xf32>
    %133 = arith.mulf %132, %131 : vector<8x128xf32>
    %cst_37 = arith.constant 5.000000e-01 : f32
    %134 = vector.broadcast %cst_37 : f32 to vector<8x128xf32>
    %135 = arith.addf %133, %134 : vector<8x128xf32>
    %136 = arith.select %5, %131, %135 : vector<8x128xi1>, vector<8x128xf32>
    %137 = vector.extract_strided_slice %136 {offsets = [0, 0], sizes = [8, 32], strides = [1, 1]} : vector<8x128xf32> to vector<8x32xf32>
    %138 = vector.extract_strided_slice %136 {offsets = [0, 32], sizes = [8, 32], strides = [1, 1]} : vector<8x128xf32> to vector<8x32xf32>
    %139 = vector.extract_strided_slice %136 {offsets = [0, 64], sizes = [8, 32], strides = [1, 1]} : vector<8x128xf32> to vector<8x32xf32>
    %140 = vector.extract_strided_slice %136 {offsets = [0, 96], sizes = [8, 32], strides = [1, 1]} : vector<8x128xf32> to vector<8x32xf32>
    %141 = arith.mulf %138, %122 : vector<8x32xf32>
    %142 = arith.mulf %137, %139 : vector<8x32xf32>
    %143 = arith.addf %141, %142 : vector<8x32xf32>
    %144 = math.tanh %143 : vector<8x32xf32>
    %145 = arith.mulf %140, %144 : vector<8x32xf32>
    %c40 = arith.constant 40 : index
    %c0_38 = arith.constant 0 : index
    %146 = vector.load %arg7[%c40, %c0_38] : memref<64x32xf32, #tpu.memory_space<vmem>>, vector<8x32xf32>
    tpu.vector_store %arg7[%c40, %c0_38], %145 {strides = array<i32>} : memref<64x32xf32, #tpu.memory_space<vmem>>, vector<8x32xf32>,
    %147 = vector.extract_strided_slice %16 {offsets = [48, 0], sizes = [8, 128], strides = [1, 1]} : vector<64x128xf32> to vector<8x128xf32>
    %148 = arith.truncf %145 : vector<8x32xf32> to vector<8x32xbf16>
    %cst_39 = arith.constant dense<0.000000e+00> : vector<8x128xf32>
    %149 = tpu.matmul %148, %18, %cst_39 {dimension_numbers = #tpu.dot_dimension_numbers<[1], [0], [0], [1], [0, 0, 1, 1], [], []>} : vector<8x32xbf16>, vector<32x128xbf16>, vector<8x128xf32> -> vector<8x128xf32>
    %150 = arith.addf %147, %149 : vector<8x128xf32>
    %151 = arith.mulf %150, %8 : vector<8x128xf32>
    %152 = math.tanh %151 : vector<8x128xf32>
    %cst_40 = arith.constant 5.000000e-01 : f32
    %153 = vector.broadcast %cst_40 : f32 to vector<8x128xf32>
    %154 = arith.mulf %153, %152 : vector<8x128xf32>
    %cst_41 = arith.constant 5.000000e-01 : f32
    %155 = vector.broadcast %cst_41 : f32 to vector<8x128xf32>
    %156 = arith.addf %154, %155 : vector<8x128xf32>
    %157 = arith.select %5, %152, %156 : vector<8x128xi1>, vector<8x128xf32>
    %158 = vector.extract_strided_slice %157 {offsets = [0, 0], sizes = [8, 32], strides = [1, 1]} : vector<8x128xf32> to vector<8x32xf32>
    %159 = vector.extract_strided_slice %157 {offsets = [0, 32], sizes = [8, 32], strides = [1, 1]} : vector<8x128xf32> to vector<8x32xf32>
    %160 = vector.extract_strided_slice %157 {offsets = [0, 64], sizes = [8, 32], strides = [1, 1]} : vector<8x128xf32> to vector<8x32xf32>
    %161 = vector.extract_strided_slice %157 {offsets = [0, 96], sizes = [8, 32], strides = [1, 1]} : vector<8x128xf32> to vector<8x32xf32>
    %162 = arith.mulf %159, %143 : vector<8x32xf32>
    %163 = arith.mulf %158, %160 : vector<8x32xf32>
    %164 = arith.addf %162, %163 : vector<8x32xf32>
    %165 = math.tanh %164 : vector<8x32xf32>
    %166 = arith.mulf %161, %165 : vector<8x32xf32>
    %c48 = arith.constant 48 : index
    %c0_42 = arith.constant 0 : index
    %167 = vector.load %arg7[%c48, %c0_42] : memref<64x32xf32, #tpu.memory_space<vmem>>, vector<8x32xf32>
    tpu.vector_store %arg7[%c48, %c0_42], %166 {strides = array<i32>} : memref<64x32xf32, #tpu.memory_space<vmem>>, vector<8x32xf32>,
    %168 = vector.extract_strided_slice %16 {offsets = [56, 0], sizes = [8, 128], strides = [1, 1]} : vector<64x128xf32> to vector<8x128xf32>
    %169 = arith.truncf %166 : vector<8x32xf32> to vector<8x32xbf16>
    %cst_43 = arith.constant dense<0.000000e+00> : vector<8x128xf32>
    %170 = tpu.matmul %169, %18, %cst_43 {dimension_numbers = #tpu.dot_dimension_numbers<[1], [0], [0], [1], [0, 0, 1, 1], [], []>} : vector<8x32xbf16>, vector<32x128xbf16>, vector<8x128xf32> -> vector<8x128xf32>
    %171 = arith.addf %168, %170 : vector<8x128xf32>
    %172 = arith.mulf %171, %8 : vector<8x128xf32>
    %173 = math.tanh %172 : vector<8x128xf32>
    %cst_44 = arith.constant 5.000000e-01 : f32
    %174 = vector.broadcast %cst_44 : f32 to vector<8x128xf32>
    %175 = arith.mulf %174, %173 : vector<8x128xf32>
    %cst_45 = arith.constant 5.000000e-01 : f32
    %176 = vector.broadcast %cst_45 : f32 to vector<8x128xf32>
    %177 = arith.addf %175, %176 : vector<8x128xf32>
    %178 = arith.select %5, %173, %177 : vector<8x128xi1>, vector<8x128xf32>
    %179 = vector.extract_strided_slice %178 {offsets = [0, 0], sizes = [8, 32], strides = [1, 1]} : vector<8x128xf32> to vector<8x32xf32>
    %180 = vector.extract_strided_slice %178 {offsets = [0, 32], sizes = [8, 32], strides = [1, 1]} : vector<8x128xf32> to vector<8x32xf32>
    %181 = vector.extract_strided_slice %178 {offsets = [0, 64], sizes = [8, 32], strides = [1, 1]} : vector<8x128xf32> to vector<8x32xf32>
    %182 = vector.extract_strided_slice %178 {offsets = [0, 96], sizes = [8, 32], strides = [1, 1]} : vector<8x128xf32> to vector<8x32xf32>
    %183 = arith.mulf %180, %164 : vector<8x32xf32>
    %184 = arith.mulf %179, %181 : vector<8x32xf32>
    %185 = arith.addf %183, %184 : vector<8x32xf32>
    %186 = math.tanh %185 : vector<8x32xf32>
    %187 = arith.mulf %182, %186 : vector<8x32xf32>
    %c56 = arith.constant 56 : index
    %c0_46 = arith.constant 0 : index
    %188 = vector.load %arg7[%c56, %c0_46] : memref<64x32xf32, #tpu.memory_space<vmem>>, vector<8x32xf32>
    tpu.vector_store %arg7[%c56, %c0_46], %187 {strides = array<i32>} : memref<64x32xf32, #tpu.memory_space<vmem>>, vector<8x32xf32>,
    %c0_47 = arith.constant 0 : index
    %c0_48 = arith.constant 0 : index
    %189 = vector.load %arg7[%c0_47, %c0_48] : memref<64x32xf32, #tpu.memory_space<vmem>>, vector<64x32xf32>
    %190 = arith.truncf %189 : vector<64x32xf32> to vector<64x32xbf16>
    %c1 = arith.constant 1 : index
    %c0_49 = arith.constant 0 : index
    %c0_50 = arith.constant 0 : index
    %191 = vector.load %arg1[%c1, %c0_49, %c0_50] : memref<2x32x128xbf16, #tpu.memory_space<vmem>>, vector<1x32x128xbf16>
    %192 = vector.shape_cast %191 : vector<1x32x128xbf16> to vector<32x128xbf16>
    %cst_51 = arith.constant dense<0.000000e+00> : vector<64x128xf32>
    %193 = tpu.matmul %190, %192, %cst_51 {dimension_numbers = #tpu.dot_dimension_numbers<[1], [0], [0], [1], [0, 0, 1, 1], [], []>} : vector<64x32xbf16>, vector<32x128xbf16>, vector<64x128xf32> -> vector<64x128xf32>
    %c1_52 = arith.constant 1 : index
    %c0_53 = arith.constant 0 : index
    %c0_54 = arith.constant 0 : index
    %194 = vector.load %arg3[%c1_52, %c0_53, %c0_54] : memref<2x1x128xf32, #tpu.memory_space<vmem>>, vector<1x1x128xf32>
    %195 = vector.shape_cast %194 : vector<1x1x128xf32> to vector<1x128xf32>
    %196 = vector.broadcast %195 : vector<1x128xf32> to vector<64x128xf32>
    %197 = arith.addf %193, %196 : vector<64x128xf32>
    %c1_55 = arith.constant 1 : index
    %c0_56 = arith.constant 0 : index
    %c0_57 = arith.constant 0 : index
    %198 = vector.load %arg2[%c1_55, %c0_56, %c0_57] : memref<2x32x128xbf16, #tpu.memory_space<vmem>>, vector<1x32x128xbf16>
    %199 = vector.shape_cast %198 : vector<1x32x128xbf16> to vector<32x128xbf16>
    %cst_58 = arith.constant 0.000000e+00 : f32
    %200 = vector.broadcast %cst_58 : f32 to vector<8x32xf32>
    %cst_59 = arith.constant 0.000000e+00 : f32
    %201 = vector.broadcast %cst_59 : f32 to vector<8x32xf32>
    %202 = vector.extract_strided_slice %197 {offsets = [0, 0], sizes = [8, 128], strides = [1, 1]} : vector<64x128xf32> to vector<8x128xf32>
    %203 = arith.truncf %200 : vector<8x32xf32> to vector<8x32xbf16>
    %cst_60 = arith.constant dense<0.000000e+00> : vector<8x128xf32>
    %204 = tpu.matmul %203, %199, %cst_60 {dimension_numbers = #tpu.dot_dimension_numbers<[1], [0], [0], [1], [0, 0, 1, 1], [], []>} : vector<8x32xbf16>, vector<32x128xbf16>, vector<8x128xf32> -> vector<8x128xf32>
    %205 = arith.addf %202, %204 : vector<8x128xf32>
    %206 = arith.mulf %205, %8 : vector<8x128xf32>
    %207 = math.tanh %206 : vector<8x128xf32>
    %cst_61 = arith.constant 5.000000e-01 : f32
    %208 = vector.broadcast %cst_61 : f32 to vector<8x128xf32>
    %209 = arith.mulf %208, %207 : vector<8x128xf32>
    %cst_62 = arith.constant 5.000000e-01 : f32
    %210 = vector.broadcast %cst_62 : f32 to vector<8x128xf32>
    %211 = arith.addf %209, %210 : vector<8x128xf32>
    %212 = arith.select %5, %207, %211 : vector<8x128xi1>, vector<8x128xf32>
    %213 = vector.extract_strided_slice %212 {offsets = [0, 0], sizes = [8, 32], strides = [1, 1]} : vector<8x128xf32> to vector<8x32xf32>
    %214 = vector.extract_strided_slice %212 {offsets = [0, 32], sizes = [8, 32], strides = [1, 1]} : vector<8x128xf32> to vector<8x32xf32>
    %215 = vector.extract_strided_slice %212 {offsets = [0, 64], sizes = [8, 32], strides = [1, 1]} : vector<8x128xf32> to vector<8x32xf32>
    %216 = vector.extract_strided_slice %212 {offsets = [0, 96], sizes = [8, 32], strides = [1, 1]} : vector<8x128xf32> to vector<8x32xf32>
    %217 = arith.mulf %214, %201 : vector<8x32xf32>
    %218 = arith.mulf %213, %215 : vector<8x32xf32>
    %219 = arith.addf %217, %218 : vector<8x32xf32>
    %220 = math.tanh %219 : vector<8x32xf32>
    %221 = arith.mulf %216, %220 : vector<8x32xf32>
    %222 = vector.extract_strided_slice %197 {offsets = [8, 0], sizes = [8, 128], strides = [1, 1]} : vector<64x128xf32> to vector<8x128xf32>
    %223 = arith.truncf %221 : vector<8x32xf32> to vector<8x32xbf16>
    %cst_63 = arith.constant dense<0.000000e+00> : vector<8x128xf32>
    %224 = tpu.matmul %223, %199, %cst_63 {dimension_numbers = #tpu.dot_dimension_numbers<[1], [0], [0], [1], [0, 0, 1, 1], [], []>} : vector<8x32xbf16>, vector<32x128xbf16>, vector<8x128xf32> -> vector<8x128xf32>
    %225 = arith.addf %222, %224 : vector<8x128xf32>
    %226 = arith.mulf %225, %8 : vector<8x128xf32>
    %227 = math.tanh %226 : vector<8x128xf32>
    %cst_64 = arith.constant 5.000000e-01 : f32
    %228 = vector.broadcast %cst_64 : f32 to vector<8x128xf32>
    %229 = arith.mulf %228, %227 : vector<8x128xf32>
    %cst_65 = arith.constant 5.000000e-01 : f32
    %230 = vector.broadcast %cst_65 : f32 to vector<8x128xf32>
    %231 = arith.addf %229, %230 : vector<8x128xf32>
    %232 = arith.select %5, %227, %231 : vector<8x128xi1>, vector<8x128xf32>
    %233 = vector.extract_strided_slice %232 {offsets = [0, 0], sizes = [8, 32], strides = [1, 1]} : vector<8x128xf32> to vector<8x32xf32>
    %234 = vector.extract_strided_slice %232 {offsets = [0, 32], sizes = [8, 32], strides = [1, 1]} : vector<8x128xf32> to vector<8x32xf32>
    %235 = vector.extract_strided_slice %232 {offsets = [0, 64], sizes = [8, 32], strides = [1, 1]} : vector<8x128xf32> to vector<8x32xf32>
    %236 = vector.extract_strided_slice %232 {offsets = [0, 96], sizes = [8, 32], strides = [1, 1]} : vector<8x128xf32> to vector<8x32xf32>
    %237 = arith.mulf %234, %219 : vector<8x32xf32>
    %238 = arith.mulf %233, %235 : vector<8x32xf32>
    %239 = arith.addf %237, %238 : vector<8x32xf32>
    %240 = math.tanh %239 : vector<8x32xf32>
    %241 = arith.mulf %236, %240 : vector<8x32xf32>
    %242 = vector.extract_strided_slice %197 {offsets = [16, 0], sizes = [8, 128], strides = [1, 1]} : vector<64x128xf32> to vector<8x128xf32>
    %243 = arith.truncf %241 : vector<8x32xf32> to vector<8x32xbf16>
    %cst_66 = arith.constant dense<0.000000e+00> : vector<8x128xf32>
    %244 = tpu.matmul %243, %199, %cst_66 {dimension_numbers = #tpu.dot_dimension_numbers<[1], [0], [0], [1], [0, 0, 1, 1], [], []>} : vector<8x32xbf16>, vector<32x128xbf16>, vector<8x128xf32> -> vector<8x128xf32>
    %245 = arith.addf %242, %244 : vector<8x128xf32>
    %246 = arith.mulf %245, %8 : vector<8x128xf32>
    %247 = math.tanh %246 : vector<8x128xf32>
    %cst_67 = arith.constant 5.000000e-01 : f32
    %248 = vector.broadcast %cst_67 : f32 to vector<8x128xf32>
    %249 = arith.mulf %248, %247 : vector<8x128xf32>
    %cst_68 = arith.constant 5.000000e-01 : f32
    %250 = vector.broadcast %cst_68 : f32 to vector<8x128xf32>
    %251 = arith.addf %249, %250 : vector<8x128xf32>
    %252 = arith.select %5, %247, %251 : vector<8x128xi1>, vector<8x128xf32>
    %253 = vector.extract_strided_slice %252 {offsets = [0, 0], sizes = [8, 32], strides = [1, 1]} : vector<8x128xf32> to vector<8x32xf32>
    %254 = vector.extract_strided_slice %252 {offsets = [0, 32], sizes = [8, 32], strides = [1, 1]} : vector<8x128xf32> to vector<8x32xf32>
    %255 = vector.extract_strided_slice %252 {offsets = [0, 64], sizes = [8, 32], strides = [1, 1]} : vector<8x128xf32> to vector<8x32xf32>
    %256 = vector.extract_strided_slice %252 {offsets = [0, 96], sizes = [8, 32], strides = [1, 1]} : vector<8x128xf32> to vector<8x32xf32>
    %257 = arith.mulf %254, %239 : vector<8x32xf32>
    %258 = arith.mulf %253, %255 : vector<8x32xf32>
    %259 = arith.addf %257, %258 : vector<8x32xf32>
    %260 = math.tanh %259 : vector<8x32xf32>
    %261 = arith.mulf %256, %260 : vector<8x32xf32>
    %262 = vector.extract_strided_slice %197 {offsets = [24, 0], sizes = [8, 128], strides = [1, 1]} : vector<64x128xf32> to vector<8x128xf32>
    %263 = arith.truncf %261 : vector<8x32xf32> to vector<8x32xbf16>
    %cst_69 = arith.constant dense<0.000000e+00> : vector<8x128xf32>
    %264 = tpu.matmul %263, %199, %cst_69 {dimension_numbers = #tpu.dot_dimension_numbers<[1], [0], [0], [1], [0, 0, 1, 1], [], []>} : vector<8x32xbf16>, vector<32x128xbf16>, vector<8x128xf32> -> vector<8x128xf32>
    %265 = arith.addf %262, %264 : vector<8x128xf32>
    %266 = arith.mulf %265, %8 : vector<8x128xf32>
    %267 = math.tanh %266 : vector<8x128xf32>
    %cst_70 = arith.constant 5.000000e-01 : f32
    %268 = vector.broadcast %cst_70 : f32 to vector<8x128xf32>
    %269 = arith.mulf %268, %267 : vector<8x128xf32>
    %cst_71 = arith.constant 5.000000e-01 : f32
    %270 = vector.broadcast %cst_71 : f32 to vector<8x128xf32>
    %271 = arith.addf %269, %270 : vector<8x128xf32>
    %272 = arith.select %5, %267, %271 : vector<8x128xi1>, vector<8x128xf32>
    %273 = vector.extract_strided_slice %272 {offsets = [0, 0], sizes = [8, 32], strides = [1, 1]} : vector<8x128xf32> to vector<8x32xf32>
    %274 = vector.extract_strided_slice %272 {offsets = [0, 32], sizes = [8, 32], strides = [1, 1]} : vector<8x128xf32> to vector<8x32xf32>
    %275 = vector.extract_strided_slice %272 {offsets = [0, 64], sizes = [8, 32], strides = [1, 1]} : vector<8x128xf32> to vector<8x32xf32>
    %276 = vector.extract_strided_slice %272 {offsets = [0, 96], sizes = [8, 32], strides = [1, 1]} : vector<8x128xf32> to vector<8x32xf32>
    %277 = arith.mulf %274, %259 : vector<8x32xf32>
    %278 = arith.mulf %273, %275 : vector<8x32xf32>
    %279 = arith.addf %277, %278 : vector<8x32xf32>
    %280 = math.tanh %279 : vector<8x32xf32>
    %281 = arith.mulf %276, %280 : vector<8x32xf32>
    %282 = vector.extract_strided_slice %197 {offsets = [32, 0], sizes = [8, 128], strides = [1, 1]} : vector<64x128xf32> to vector<8x128xf32>
    %283 = arith.truncf %281 : vector<8x32xf32> to vector<8x32xbf16>
    %cst_72 = arith.constant dense<0.000000e+00> : vector<8x128xf32>
    %284 = tpu.matmul %283, %199, %cst_72 {dimension_numbers = #tpu.dot_dimension_numbers<[1], [0], [0], [1], [0, 0, 1, 1], [], []>} : vector<8x32xbf16>, vector<32x128xbf16>, vector<8x128xf32> -> vector<8x128xf32>
    %285 = arith.addf %282, %284 : vector<8x128xf32>
    %286 = arith.mulf %285, %8 : vector<8x128xf32>
    %287 = math.tanh %286 : vector<8x128xf32>
    %cst_73 = arith.constant 5.000000e-01 : f32
    %288 = vector.broadcast %cst_73 : f32 to vector<8x128xf32>
    %289 = arith.mulf %288, %287 : vector<8x128xf32>
    %cst_74 = arith.constant 5.000000e-01 : f32
    %290 = vector.broadcast %cst_74 : f32 to vector<8x128xf32>
    %291 = arith.addf %289, %290 : vector<8x128xf32>
    %292 = arith.select %5, %287, %291 : vector<8x128xi1>, vector<8x128xf32>
    %293 = vector.extract_strided_slice %292 {offsets = [0, 0], sizes = [8, 32], strides = [1, 1]} : vector<8x128xf32> to vector<8x32xf32>
    %294 = vector.extract_strided_slice %292 {offsets = [0, 32], sizes = [8, 32], strides = [1, 1]} : vector<8x128xf32> to vector<8x32xf32>
    %295 = vector.extract_strided_slice %292 {offsets = [0, 64], sizes = [8, 32], strides = [1, 1]} : vector<8x128xf32> to vector<8x32xf32>
    %296 = vector.extract_strided_slice %292 {offsets = [0, 96], sizes = [8, 32], strides = [1, 1]} : vector<8x128xf32> to vector<8x32xf32>
    %297 = arith.mulf %294, %279 : vector<8x32xf32>
    %298 = arith.mulf %293, %295 : vector<8x32xf32>
    %299 = arith.addf %297, %298 : vector<8x32xf32>
    %300 = math.tanh %299 : vector<8x32xf32>
    %301 = arith.mulf %296, %300 : vector<8x32xf32>
    %302 = vector.extract_strided_slice %197 {offsets = [40, 0], sizes = [8, 128], strides = [1, 1]} : vector<64x128xf32> to vector<8x128xf32>
    %303 = arith.truncf %301 : vector<8x32xf32> to vector<8x32xbf16>
    %cst_75 = arith.constant dense<0.000000e+00> : vector<8x128xf32>
    %304 = tpu.matmul %303, %199, %cst_75 {dimension_numbers = #tpu.dot_dimension_numbers<[1], [0], [0], [1], [0, 0, 1, 1], [], []>} : vector<8x32xbf16>, vector<32x128xbf16>, vector<8x128xf32> -> vector<8x128xf32>
    %305 = arith.addf %302, %304 : vector<8x128xf32>
    %306 = arith.mulf %305, %8 : vector<8x128xf32>
    %307 = math.tanh %306 : vector<8x128xf32>
    %cst_76 = arith.constant 5.000000e-01 : f32
    %308 = vector.broadcast %cst_76 : f32 to vector<8x128xf32>
    %309 = arith.mulf %308, %307 : vector<8x128xf32>
    %cst_77 = arith.constant 5.000000e-01 : f32
    %310 = vector.broadcast %cst_77 : f32 to vector<8x128xf32>
    %311 = arith.addf %309, %310 : vector<8x128xf32>
    %312 = arith.select %5, %307, %311 : vector<8x128xi1>, vector<8x128xf32>
    %313 = vector.extract_strided_slice %312 {offsets = [0, 0], sizes = [8, 32], strides = [1, 1]} : vector<8x128xf32> to vector<8x32xf32>
    %314 = vector.extract_strided_slice %312 {offsets = [0, 32], sizes = [8, 32], strides = [1, 1]} : vector<8x128xf32> to vector<8x32xf32>
    %315 = vector.extract_strided_slice %312 {offsets = [0, 64], sizes = [8, 32], strides = [1, 1]} : vector<8x128xf32> to vector<8x32xf32>
    %316 = vector.extract_strided_slice %312 {offsets = [0, 96], sizes = [8, 32], strides = [1, 1]} : vector<8x128xf32> to vector<8x32xf32>
    %317 = arith.mulf %314, %299 : vector<8x32xf32>
    %318 = arith.mulf %313, %315 : vector<8x32xf32>
    %319 = arith.addf %317, %318 : vector<8x32xf32>
    %320 = math.tanh %319 : vector<8x32xf32>
    %321 = arith.mulf %316, %320 : vector<8x32xf32>
    %322 = vector.extract_strided_slice %197 {offsets = [48, 0], sizes = [8, 128], strides = [1, 1]} : vector<64x128xf32> to vector<8x128xf32>
    %323 = arith.truncf %321 : vector<8x32xf32> to vector<8x32xbf16>
    %cst_78 = arith.constant dense<0.000000e+00> : vector<8x128xf32>
    %324 = tpu.matmul %323, %199, %cst_78 {dimension_numbers = #tpu.dot_dimension_numbers<[1], [0], [0], [1], [0, 0, 1, 1], [], []>} : vector<8x32xbf16>, vector<32x128xbf16>, vector<8x128xf32> -> vector<8x128xf32>
    %325 = arith.addf %322, %324 : vector<8x128xf32>
    %326 = arith.mulf %325, %8 : vector<8x128xf32>
    %327 = math.tanh %326 : vector<8x128xf32>
    %cst_79 = arith.constant 5.000000e-01 : f32
    %328 = vector.broadcast %cst_79 : f32 to vector<8x128xf32>
    %329 = arith.mulf %328, %327 : vector<8x128xf32>
    %cst_80 = arith.constant 5.000000e-01 : f32
    %330 = vector.broadcast %cst_80 : f32 to vector<8x128xf32>
    %331 = arith.addf %329, %330 : vector<8x128xf32>
    %332 = arith.select %5, %327, %331 : vector<8x128xi1>, vector<8x128xf32>
    %333 = vector.extract_strided_slice %332 {offsets = [0, 0], sizes = [8, 32], strides = [1, 1]} : vector<8x128xf32> to vector<8x32xf32>
    %334 = vector.extract_strided_slice %332 {offsets = [0, 32], sizes = [8, 32], strides = [1, 1]} : vector<8x128xf32> to vector<8x32xf32>
    %335 = vector.extract_strided_slice %332 {offsets = [0, 64], sizes = [8, 32], strides = [1, 1]} : vector<8x128xf32> to vector<8x32xf32>
    %336 = vector.extract_strided_slice %332 {offsets = [0, 96], sizes = [8, 32], strides = [1, 1]} : vector<8x128xf32> to vector<8x32xf32>
    %337 = arith.mulf %334, %319 : vector<8x32xf32>
    %338 = arith.mulf %333, %335 : vector<8x32xf32>
    %339 = arith.addf %337, %338 : vector<8x32xf32>
    %340 = math.tanh %339 : vector<8x32xf32>
    %341 = arith.mulf %336, %340 : vector<8x32xf32>
    %342 = vector.extract_strided_slice %197 {offsets = [56, 0], sizes = [8, 128], strides = [1, 1]} : vector<64x128xf32> to vector<8x128xf32>
    %343 = arith.truncf %341 : vector<8x32xf32> to vector<8x32xbf16>
    %cst_81 = arith.constant dense<0.000000e+00> : vector<8x128xf32>
    %344 = tpu.matmul %343, %199, %cst_81 {dimension_numbers = #tpu.dot_dimension_numbers<[1], [0], [0], [1], [0, 0, 1, 1], [], []>} : vector<8x32xbf16>, vector<32x128xbf16>, vector<8x128xf32> -> vector<8x128xf32>
    %345 = arith.addf %342, %344 : vector<8x128xf32>
    %346 = arith.mulf %345, %8 : vector<8x128xf32>
    %347 = math.tanh %346 : vector<8x128xf32>
    %cst_82 = arith.constant 5.000000e-01 : f32
    %348 = vector.broadcast %cst_82 : f32 to vector<8x128xf32>
    %349 = arith.mulf %348, %347 : vector<8x128xf32>
    %cst_83 = arith.constant 5.000000e-01 : f32
    %350 = vector.broadcast %cst_83 : f32 to vector<8x128xf32>
    %351 = arith.addf %349, %350 : vector<8x128xf32>
    %352 = arith.select %5, %347, %351 : vector<8x128xi1>, vector<8x128xf32>
    %353 = vector.extract_strided_slice %352 {offsets = [0, 0], sizes = [8, 32], strides = [1, 1]} : vector<8x128xf32> to vector<8x32xf32>
    %354 = vector.extract_strided_slice %352 {offsets = [0, 32], sizes = [8, 32], strides = [1, 1]} : vector<8x128xf32> to vector<8x32xf32>
    %355 = vector.extract_strided_slice %352 {offsets = [0, 64], sizes = [8, 32], strides = [1, 1]} : vector<8x128xf32> to vector<8x32xf32>
    %356 = vector.extract_strided_slice %352 {offsets = [0, 96], sizes = [8, 32], strides = [1, 1]} : vector<8x128xf32> to vector<8x32xf32>
    %357 = arith.mulf %354, %339 : vector<8x32xf32>
    %358 = arith.mulf %353, %355 : vector<8x32xf32>
    %359 = arith.addf %357, %358 : vector<8x32xf32>
    %360 = math.tanh %359 : vector<8x32xf32>
    %361 = arith.mulf %356, %360 : vector<8x32xf32>
    %c0_84 = arith.constant 0 : index
    %c0_85 = arith.constant 0 : index
    %362 = vector.load %arg4[%c0_84, %c0_85] : memref<1x32xf32, #tpu.memory_space<vmem>>, vector<1x32xf32>
    %363 = vector.broadcast %362 : vector<1x32xf32> to vector<8x32xf32>
    %364 = arith.mulf %361, %363 : vector<8x32xf32>
    %cst_86 = arith.constant dense<0.000000e+00> : vector<8xf32>
    %365 = vector.multi_reduction <add>, %364, %cst_86 [1] : vector<8x32xf32> to vector<8xf32>
    %366 = vector.shape_cast %365 : vector<8xf32> to vector<8x1xf32>
    %c0_87 = arith.constant 0 : index
    %c0_88 = arith.constant 0 : index
    %367 = vector.load %arg5[%c0_87, %c0_88] : memref<1x1xf32, #tpu.memory_space<vmem>>, vector<1x1xf32>
    %368 = vector.broadcast %367 : vector<1x1xf32> to vector<8x1xf32>
    %369 = arith.addf %366, %368 : vector<8x1xf32>
    %370 = vector.shape_cast %369 : vector<8x1xf32> to vector<8x1xf32>
    %371 = vector.broadcast %370 : vector<8x1xf32> to vector<8x128xf32>
    %c0_89 = arith.constant 0 : index
    %c0_90 = arith.constant 0 : index
    %372 = vector.load %arg6[%c0_89, %c0_90] : memref<8x128xf32, #tpu.memory_space<vmem>>, vector<8x128xf32>
    tpu.vector_store %arg6[%c0_89, %c0_90], %371 {strides = array<i32>} : memref<8x128xf32, #tpu.memory_space<vmem>>, vector<8x128xf32>,
    return
  }
}

</mosaic_0001>

<llo_original>
// kernel: value_predictor_forward.1
$region0: #{value_predictor_forward.1}
  #allocation0 [shape = 'u32[]', space=smem, size = 0x4, offset = 0x4, fixed_abs, tag = 'smem constant byte address 0x4 - core index']
  #allocation1 [shape = 'u32[72,128]{1,0:T(1,128)}', space=vmem, size = 0x9000, scoped, tag = 'internal scratch']
  #allocation2 [shape = 'f32[64,32]{1,0:T(8,128)}', space=vmem, size = 0x8000, scoped, tag = 'scratch operand']
  #allocation3 [shape = 'f32[1,1]{1,0:T(1,128)S(1)}', space=vmem, size = 0x200, scoped, tag = 'scoped memory for value_predictor_forward.1']
  %s0 = inlined_call_operand.vmem [shape: bf16[64,32], index: 0, kind: input, shape index: {}]
  %s1 = inlined_call_operand.vmem [shape: bf16[2,32,128], index: 1, kind: input, shape index: {}]
  %s2 = inlined_call_operand.vmem [shape: bf16[2,32,128], index: 2, kind: input, shape index: {}]
  %s3 = inlined_call_operand.vmem [shape: f32[2,1,128], index: 3, kind: input, shape index: {}]
  %s4 = inlined_call_operand.vmem [shape: f32[1,32], index: 4, kind: input, shape index: {}]
  %s5 = inlined_call_operand.<no memory space> [shape: f32[1,1], index: 5, kind: input, shape index: {}]
  %s6 = inlined_call_operand.vmem [shape: f32[8,128], index: 6, kind: output, shape index: {}]
  %s7 = sld [smem:[#allocation0]]
  $region34: #{value_predictor_forward.1} parent=0
    _
  %s9 = ssub.s32 1, %s7
  %s10 = scalar_select 0, %s9, %s7
  %v11 = vstv %s5
  %12 = vst [vmem:[#allocation3] sm:$0x1] %v11
  // Predicated region
  $region2: #{value_predictor_forward.1} parent=0 // pred_check
    _
  $region3: #{value_predictor_forward.1} parent=0 // pred_check_branch
    %14 = sbr.rel (0) target = $region5
  $region4: #{value_predictor_forward.1} parent=0 // pred_region
    _
  $region5: #{value_predictor_forward.1} parent=0 // pred_fallthru
    _
  // Predicated region
  $region6: #{value_predictor_forward.1} parent=0 // pred_check
    _
  $region7: #{value_predictor_forward.1} parent=0 // pred_check_branch
    %16 = sbr.rel (0) target = $region9
  $region8: #{value_predictor_forward.1} parent=0 // pred_region
    _
  $region9: #{value_predictor_forward.1} parent=0 // pred_fallthru
    _
  // Predicated region
  $region10: #{value_predictor_forward.1} parent=0 // pred_check
    _
  $region11: #{value_predictor_forward.1} parent=0 // pred_check_branch
    %18 = sbr.rel (0) target = $region13
  $region12: #{value_predictor_forward.1} parent=0 // pred_region
    _
  $region13: #{value_predictor_forward.1} parent=0 // pred_fallthru
    _
  // Predicated region
  $region14: #{value_predictor_forward.1} parent=0 // pred_check
    _
  $region15: #{value_predictor_forward.1} parent=0 // pred_check_branch
    %20 = sbr.rel (0) target = $region17
  $region16: #{value_predictor_forward.1} parent=0 // pred_region
    _
  $region17: #{value_predictor_forward.1} parent=0 // pred_fallthru
    _
  // Predicated region
  $region18: #{value_predictor_forward.1} parent=0 // pred_check
    _
  $region19: #{value_predictor_forward.1} parent=0 // pred_check_branch
    %22 = sbr.rel (0) target = $region21
  $region20: #{value_predictor_forward.1} parent=0 // pred_region
    _
  $region21: #{value_predictor_forward.1} parent=0 // pred_fallthru
    _
  // Predicated region
  $region22: #{value_predictor_forward.1} parent=0 // pred_check
    _
  $region23: #{value_predictor_forward.1} parent=0 // pred_check_branch
    %24 = sbr.rel (0) target = $region25
  $region24: #{value_predictor_forward.1} parent=0 // pred_region
    _
  $region25: #{value_predictor_forward.1} parent=0 // pred_fallthru
    _
  %v26 = vlaneseq
  %v27 = vand.u32 %v26, 127
  %vm28 = vcmp.ge.s32.totalorder %v27, 64
  %vm29 = vcmp.lt.s32.totalorder %v27, 96
  %vm30 = vmand %vm28, %vm29
  %v31 = vsel %vm30, 1.0, 0.5
  %v32 = vld [vmem:[%s0] sm:$0xf]
  %v33 = vld [vmem:[%s0 + $0x4] sm:$0xf]
  %v34 = vld [vmem:[%s0 + $0x8] sm:$0xf]
  %v35 = vld [vmem:[%s0 + $0xc] sm:$0xf]
  %v36 = vld [vmem:[%s0 + $0x10] sm:$0xf]
  %v37 = vld [vmem:[%s0 + $0x14] sm:$0xf]
  %v38 = vld [vmem:[%s0 + $0x18] sm:$0xf]
  %v39 = vld [vmem:[%s0 + $0x1c] sm:$0xf]
  %v40 = vld [vmem:[%s1] sm:$0xf]
  %v41 = vld [vmem:[%s1 + $0x4] sm:$0xf]
  %v42 = vld [vmem:[%s1 + $0x8] sm:$0xf]
  %v43 = vld [vmem:[%s1 + $0xc] sm:$0xf]
  %v44 = vld [vmem:[%s3] sm:$0x1]
  %v46 = vperm.slane %v44, 0
  %v56 = vunpack.c.l.b16 %v32
  %v57 = vunpack.c.l.b16 %v33
  %v58 = vunpack.c.l.b16 %v34
  %v59 = vunpack.c.l.b16 %v35
  %v60 = vunpack.c.l.b16 %v36
  %v61 = vunpack.c.l.b16 %v37
  %v62 = vunpack.c.l.b16 %v38
  %v63 = vunpack.c.l.b16 %v39
  %v64 = vpack.c.b16 %v57, %v56
  %v65 = vpack.c.b16 %v59, %v58
  %v66 = vpack.c.b16 %v61, %v60
  %v67 = vpack.c.b16 %v63, %v62
  %v72 = vunpack.c.l.b16 %v40
  %v73 = vunpack.c.l.b16 %v41
  %v74 = vunpack.c.l.b16 %v42
  %v75 = vunpack.c.l.b16 %v43
  %v76 = vpack.c.b16 %v73, %v72
  %v77 = vpack.c.b16 %v75, %v74
  %vm80 = vcmask 261120
  %v82 = vsel %vm80, %v64, 0
  %v85 = vsel %vm80, %v65, 0
  %v88 = vsel %vm80, %v66, 0
  %v91 = vsel %vm80, %v67, 0
  %93 = vmatpush.bf16.msra.mxu0 0
  %94 = vmatpush.bf16.msra.mxu0 0
  %95 = vmatpush.bf16.msra.mxu0 0
  %96 = vmatpush.bf16.msra.mxu0 0
  %97 = vmatpush.bf16.msra.mxu0 0
  %98 = vmatpush.bf16.msra.mxu0 0
  %99 = vmatpush.bf16.msra.mxu0 %v77
  %100 = vmatpush.bf16.msra.mxu0 %v76
  %101 = vmatmul.bf16.gmra.mxu0 %v82
  %v102 = vpop.f32.mrf.mxu0
  %v103 = vadd.f32 %v46, %v102
  %v104 = vpop.f32.mrf.mxu0
  %v105 = vadd.f32 %v46, %v104
  %106 = vmatmul.bf16.gmra.mxu0 %v85
  %v107 = vpop.f32.mrf.mxu0
  %v108 = vadd.f32 %v46, %v107
  %v109 = vpop.f32.mrf.mxu0
  %v110 = vadd.f32 %v46, %v109
  %111 = vmatmul.bf16.gmra.mxu0 %v88
  %v112 = vpop.f32.mrf.mxu0
  %v113 = vadd.f32 %v46, %v112
  %v114 = vpop.f32.mrf.mxu0
  %v115 = vadd.f32 %v46, %v114
  %116 = vmatmul.bf16.gmra.mxu0 %v91
  %v117 = vpop.f32.mrf.mxu0
  %v118 = vadd.f32 %v46, %v117
  %v119 = vpop.f32.mrf.mxu0
  %v120 = vadd.f32 %v46, %v119
  %121 = vdwg.mxu0
  %v122 = vld [vmem:[%s2] sm:$0xf]
  %v123 = vld [vmem:[%s2 + $0x4] sm:$0xf]
  %v124 = vld [vmem:[%s2 + $0x8] sm:$0xf]
  %v125 = vld [vmem:[%s2 + $0xc] sm:$0xf]
  %v130 = vunpack.c.l.b16 %v122
  %v131 = vunpack.c.l.b16 %v123
  %v132 = vunpack.c.l.b16 %v124
  %v133 = vunpack.c.l.b16 %v125
  %v134 = vpack.c.b16 %v131, %v130
  %v135 = vpack.c.b16 %v133, %v132
  %v139 = vsel %vm80, 0, 0
  %141 = vmatpush.bf16.msra.mxu0 0
  %142 = vmatpush.bf16.msra.mxu0 0
  %143 = vmatpush.bf16.msra.mxu0 0
  %144 = vmatpush.bf16.msra.mxu0 0
  %145 = vmatpush.bf16.msra.mxu0 0
  %146 = vmatpush.bf16.msra.mxu0 0
  %147 = vmatpush.bf16.msra.mxu0 %v135
  %148 = vmatpush.bf16.msra.mxu0 %v134
  %149 = vmatmul.bf16.gmra.mxu0 %v139
  %v150 = vpop.f32.mrf.mxu0
  %v151 = vadd.f32 0.0, %v150
  %v152 = vpop.f32.mrf.mxu0
  %153 = vdwg.mxu0
  %v154 = vadd.f32 %v103, %v151
  %v155 = vmul.f32 %v154, %v31
  %v156 = vtanh.pop %v155
  %v157 = vmul.f32 %v156, 0.5
  %v158 = vadd.f32 %v157, 0.5
  %v159 = vsel %vm30, %v156, %v158
  %v160 = vmul.f32 %v159, 0.0
  %162 = vrot.lane.b32.xlu0 %v159, 64
  %v163 = vpop.permute.xlu0 %162
  %v165 = vmul.f32 %v159, %v163
  %167 = vrot.lane.b32.xlu0 %v165, 32
  %v168 = vpop.permute.xlu0 %167
  %v170 = vadd.f32 %v160, %v168
  %v171 = vtanh.pop %v170
  %173 = vrot.lane.b32.xlu0 %v171, 64
  %v174 = vpop.permute.xlu0 %173
  %v176 = vmul.f32 %v159, %v174
  %178 = vrot.lane.b32.xlu0 %v176, 32
  %v179 = vpop.permute.xlu0 %178
  %181 = vst.msk [vmem:[#allocation2] sm:$0xff] %vm80, %v179
  %v182 = vpack.c.bf16 %v176, %v176
  %184 = vrot.lane.b32.xlu0 %v182, 32
  %v185 = vpop.permute.xlu0 %184
  %v187 = vsel %vm80, %v185, 0
  %189 = vmatpush.bf16.msra.mxu0 0
  %190 = vmatpush.bf16.msra.mxu0 0
  %191 = vmatpush.bf16.msra.mxu0 0
  %192 = vmatpush.bf16.msra.mxu0 0
  %193 = vmatpush.bf16.msra.mxu0 0
  %194 = vmatpush.bf16.msra.mxu0 0
  %195 = vmatpush.bf16.msra.mxu0 %v135
  %196 = vmatpush.bf16.msra.mxu0 %v134
  %197 = vmatmul.bf16.gmra.mxu0 %v187
  %v198 = vpop.f32.mrf.mxu0
  %v199 = vadd.f32 0.0, %v198
  %v200 = vpop.f32.mrf.mxu0
  %201 = vdwg.mxu0
  %v202 = vadd.f32 %v105, %v199
  %v203 = vmul.f32 %v202, %v31
  %v204 = vtanh.pop %v203
  %v205 = vmul.f32 %v204, 0.5
  %v206 = vadd.f32 %v205, 0.5
  %v207 = vsel %vm30, %v204, %v206
  %v208 = vmul.f32 %v207, %v170
  %210 = vrot.lane.b32.xlu0 %v207, 64
  %v211 = vpop.permute.xlu0 %210
  %v213 = vmul.f32 %v207, %v211
  %215 = vrot.lane.b32.xlu0 %v213, 32
  %v216 = vpop.permute.xlu0 %215
  %v218 = vadd.f32 %v208, %v216
  %v219 = vtanh.pop %v218
  %221 = vrot.lane.b32.xlu0 %v219, 64
  %v222 = vpop.permute.xlu0 %221
  %v224 = vmul.f32 %v207, %v222
  %226 = vrot.lane.b32.xlu0 %v224, 32
  %v227 = vpop.permute.xlu0 %226
  %229 = vst.msk [vmem:[#allocation2 + $0x8] sm:$0xff] %vm80, %v227
  %v230 = vpack.c.bf16 %v224, %v224
  %232 = vrot.lane.b32.xlu0 %v230, 32
  %v233 = vpop.permute.xlu0 %232
  %v235 = vsel %vm80, %v233, 0
  %237 = vmatpush.bf16.msra.mxu0 0
  %238 = vmatpush.bf16.msra.mxu0 0
  %239 = vmatpush.bf16.msra.mxu0 0
  %240 = vmatpush.bf16.msra.mxu0 0
  %241 = vmatpush.bf16.msra.mxu0 0
  %242 = vmatpush.bf16.msra.mxu0 0
  %243 = vmatpush.bf16.msra.mxu0 %v135
  %244 = vmatpush.bf16.msra.mxu0 %v134
  %245 = vmatmul.bf16.gmra.mxu0 %v235
  %v246 = vpop.f32.mrf.mxu0
  %v247 = vadd.f32 0.0, %v246
  %v248 = vpop.f32.mrf.mxu0
  %249 = vdwg.mxu0
  %v250 = vadd.f32 %v108, %v247
  %v251 = vmul.f32 %v250, %v31
  %v252 = vtanh.pop %v251
  %v253 = vmul.f32 %v252, 0.5
  %v254 = vadd.f32 %v253, 0.5
  %v255 = vsel %vm30, %v252, %v254
  %v256 = vmul.f32 %v255, %v218
  %258 = vrot.lane.b32.xlu0 %v255, 64
  %v259 = vpop.permute.xlu0 %258
  %v261 = vmul.f32 %v255, %v259
  %263 = vrot.lane.b32.xlu0 %v261, 32
  %v264 = vpop.permute.xlu0 %263
  %v266 = vadd.f32 %v256, %v264
  %v267 = vtanh.pop %v266
  %269 = vrot.lane.b32.xlu0 %v267, 64
  %v270 = vpop.permute.xlu0 %269
  %v272 = vmul.f32 %v255, %v270
  %274 = vrot.lane.b32.xlu0 %v272, 32
  %v275 = vpop.permute.xlu0 %274
  %277 = vst.msk [vmem:[#allocation2 + $0x10] sm:$0xff] %vm80, %v275
  %v278 = vpack.c.bf16 %v272, %v272
  %280 = vrot.lane.b32.xlu0 %v278, 32
  %v281 = vpop.permute.xlu0 %280
  %v283 = vsel %vm80, %v281, 0
  %285 = vmatpush.bf16.msra.mxu0 0
  %286 = vmatpush.bf16.msra.mxu0 0
  %287 = vmatpush.bf16.msra.mxu0 0
  %288 = vmatpush.bf16.msra.mxu0 0
  %289 = vmatpush.bf16.msra.mxu0 0
  %290 = vmatpush.bf16.msra.mxu0 0
  %291 = vmatpush.bf16.msra.mxu0 %v135
  %292 = vmatpush.bf16.msra.mxu0 %v134
  %293 = vmatmul.bf16.gmra.mxu0 %v283
  %v294 = vpop.f32.mrf.mxu0
  %v295 = vadd.f32 0.0, %v294
  %v296 = vpop.f32.mrf.mxu0
  %297 = vdwg.mxu0
  %v298 = vadd.f32 %v110, %v295
  %v299 = vmul.f32 %v298, %v31
  %v300 = vtanh.pop %v299
  %v301 = vmul.f32 %v300, 0.5
  %v302 = vadd.f32 %v301, 0.5
  %v303 = vsel %vm30, %v300, %v302
  %v304 = vmul.f32 %v303, %v266
  %306 = vrot.lane.b32.xlu0 %v303, 64
  %v307 = vpop.permute.xlu0 %306
  %v309 = vmul.f32 %v303, %v307
  %311 = vrot.lane.b32.xlu0 %v309, 32
  %v312 = vpop.permute.xlu0 %311
  %v314 = vadd.f32 %v304, %v312
  %v315 = vtanh.pop %v314
  %317 = vrot.lane.b32.xlu0 %v315, 64
  %v318 = vpop.permute.xlu0 %317
  %v320 = vmul.f32 %v303, %v318
  %322 = vrot.lane.b32.xlu0 %v320, 32
  %v323 = vpop.permute.xlu0 %322
  %325 = vst.msk [vmem:[#allocation2 + $0x18] sm:$0xff] %vm80, %v323
  %v326 = vpack.c.bf16 %v320, %v320
  %328 = vrot.lane.b32.xlu0 %v326, 32
  %v329 = vpop.permute.xlu0 %328
  %v331 = vsel %vm80, %v329, 0
  %333 = vmatpush.bf16.msra.mxu0 0
  %334 = vmatpush.bf16.msra.mxu0 0
  %335 = vmatpush.bf16.msra.mxu0 0
  %336 = vmatpush.bf16.msra.mxu0 0
  %337 = vmatpush.bf16.msra.mxu0 0
  %338 = vmatpush.bf16.msra.mxu0 0
  %339 = vmatpush.bf16.msra.mxu0 %v135
  %340 = vmatpush.bf16.msra.mxu0 %v134
  %341 = vmatmul.bf16.gmra.mxu0 %v331
  %v342 = vpop.f32.mrf.mxu0
  %v343 = vadd.f32 0.0, %v342
  %v344 = vpop.f32.mrf.mxu0
  %345 = vdwg.mxu0
  %v346 = vadd.f32 %v113, %v343
  %v347 = vmul.f32 %v346, %v31
  %v348 = vtanh.pop %v347
  %v349 = vmul.f32 %v348, 0.5
  %v350 = vadd.f32 %v349, 0.5
  %v351 = vsel %vm30, %v348, %v350
  %v352 = vmul.f32 %v351, %v314
  %354 = vrot.lane.b32.xlu0 %v351, 64
  %v355 = vpop.permute.xlu0 %354
  %v357 = vmul.f32 %v351, %v355
  %359 = vrot.lane.b32.xlu0 %v357, 32
  %v360 = vpop.permute.xlu0 %359
  %v362 = vadd.f32 %v352, %v360
  %v363 = vtanh.pop %v362
  %365 = vrot.lane.b32.xlu0 %v363, 64
  %v366 = vpop.permute.xlu0 %365
  %v368 = vmul.f32 %v351, %v366
  %370 = vrot.lane.b32.xlu0 %v368, 32
  %v371 = vpop.permute.xlu0 %370
  %373 = vst.msk [vmem:[#allocation2 + $0x20] sm:$0xff] %vm80, %v371
  %v374 = vpack.c.bf16 %v368, %v368
  %376 = vrot.lane.b32.xlu0 %v374, 32
  %v377 = vpop.permute.xlu0 %376
  %v379 = vsel %vm80, %v377, 0
  %381 = vmatpush.bf16.msra.mxu0 0
  %382 = vmatpush.bf16.msra.mxu0 0
  %383 = vmatpush.bf16.msra.mxu0 0
  %384 = vmatpush.bf16.msra.mxu0 0
  %385 = vmatpush.bf16.msra.mxu0 0
  %386 = vmatpush.bf16.msra.mxu0 0
  %387 = vmatpush.bf16.msra.mxu0 %v135
  %388 = vmatpush.bf16.msra.mxu0 %v134
  %389 = vmatmul.bf16.gmra.mxu0 %v379
  %v390 = vpop.f32.mrf.mxu0
  %v391 = vadd.f32 0.0, %v390
  %v392 = vpop.f32.mrf.mxu0
  %393 = vdwg.mxu0
  %v394 = vadd.f32 %v115, %v391
  %v395 = vmul.f32 %v394, %v31
  %v396 = vtanh.pop %v395
  %v397 = vmul.f32 %v396, 0.5
  %v398 = vadd.f32 %v397, 0.5
  %v399 = vsel %vm30, %v396, %v398
  %v400 = vmul.f32 %v399, %v362
  %402 = vrot.lane.b32.xlu0 %v399, 64
  %v403 = vpop.permute.xlu0 %402
  %v405 = vmul.f32 %v399, %v403
  %407 = vrot.lane.b32.xlu0 %v405, 32
  %v408 = vpop.permute.xlu0 %407
  %v410 = vadd.f32 %v400, %v408
  %v411 = vtanh.pop %v410
  %413 = vrot.lane.b32.xlu0 %v411, 64
  %v414 = vpop.permute.xlu0 %413
  %v416 = vmul.f32 %v399, %v414
  %418 = vrot.lane.b32.xlu0 %v416, 32
  %v419 = vpop.permute.xlu0 %418
  %421 = vst.msk [vmem:[#allocation2 + $0x28] sm:$0xff] %vm80, %v419
  %v422 = vpack.c.bf16 %v416, %v416
  %424 = vrot.lane.b32.xlu0 %v422, 32
  %v425 = vpop.permute.xlu0 %424
  %v427 = vsel %vm80, %v425, 0
  %429 = vmatpush.bf16.msra.mxu0 0
  %430 = vmatpush.bf16.msra.mxu0 0
  %431 = vmatpush.bf16.msra.mxu0 0
  %432 = vmatpush.bf16.msra.mxu0 0
  %433 = vmatpush.bf16.msra.mxu0 0
  %434 = vmatpush.bf16.msra.mxu0 0
  %435 = vmatpush.bf16.msra.mxu0 %v135
  %436 = vmatpush.bf16.msra.mxu0 %v134
  %437 = vmatmul.bf16.gmra.mxu0 %v427
  %v438 = vpop.f32.mrf.mxu0
  %v439 = vadd.f32 0.0, %v438
  %v440 = vpop.f32.mrf.mxu0
  %441 = vdwg.mxu0
  %v442 = vadd.f32 %v118, %v439
  %v443 = vmul.f32 %v442, %v31
  %v444 = vtanh.pop %v443
  %v445 = vmul.f32 %v444, 0.5
  %v446 = vadd.f32 %v445, 0.5
  %v447 = vsel %vm30, %v444, %v446
  %v448 = vmul.f32 %v447, %v410
  %450 = vrot.lane.b32.xlu0 %v447, 64
  %v451 = vpop.permute.xlu0 %450
  %v453 = vmul.f32 %v447, %v451
  %455 = vrot.lane.b32.xlu0 %v453, 32
  %v456 = vpop.permute.xlu0 %455
  %v458 = vadd.f32 %v448, %v456
  %v459 = vtanh.pop %v458
  %461 = vrot.lane.b32.xlu0 %v459, 64
  %v462 = vpop.permute.xlu0 %461
  %v464 = vmul.f32 %v447, %v462
  %466 = vrot.lane.b32.xlu0 %v464, 32
  %v467 = vpop.permute.xlu0 %466
  %469 = vst.msk [vmem:[#allocation2 + $0x30] sm:$0xff] %vm80, %v467
  %v470 = vpack.c.bf16 %v464, %v464
  %472 = vrot.lane.b32.xlu0 %v470, 32
  %v473 = vpop.permute.xlu0 %472
  %v475 = vsel %vm80, %v473, 0
  %477 = vmatpush.bf16.msra.mxu0 0
  %478 = vmatpush.bf16.msra.mxu0 0
  %479 = vmatpush.bf16.msra.mxu0 0
  %480 = vmatpush.bf16.msra.mxu0 0
  %481 = vmatpush.bf16.msra.mxu0 0
  %482 = vmatpush.bf16.msra.mxu0 0
  %483 = vmatpush.bf16.msra.mxu0 %v135
  %484 = vmatpush.bf16.msra.mxu0 %v134
  %485 = vmatmul.bf16.gmra.mxu0 %v475
  %v486 = vpop.f32.mrf.mxu0
  %v487 = vadd.f32 0.0, %v486
  %v488 = vpop.f32.mrf.mxu0
  %489 = vdwg.mxu0
  %v490 = vadd.f32 %v120, %v487
  %v491 = vmul.f32 %v490, %v31
  %v492 = vtanh.pop %v491
  %v493 = vmul.f32 %v492, 0.5
  %v494 = vadd.f32 %v493, 0.5
  %v495 = vsel %vm30, %v492, %v494
  %v496 = vmul.f32 %v495, %v458
  %498 = vrot.lane.b32.xlu0 %v495, 64
  %v499 = vpop.permute.xlu0 %498
  %v501 = vmul.f32 %v495, %v499
  %503 = vrot.lane.b32.xlu0 %v501, 32
  %v504 = vpop.permute.xlu0 %503
  %v506 = vadd.f32 %v496, %v504
  %v507 = vtanh.pop %v506
  %509 = vrot.lane.b32.xlu0 %v507, 64
  %v510 = vpop.permute.xlu0 %509
  %v512 = vmul.f32 %v495, %v510
  %514 = vrot.lane.b32.xlu0 %v512, 32
  %v515 = vpop.permute.xlu0 %514
  %517 = vst.msk [vmem:[#allocation2 + $0x38] sm:$0xff] %vm80, %v515
  %v518 = vld [vmem:[#allocation2] sm:$0xff]
  %v519 = vld [vmem:[#allocation2 + $0x8] sm:$0xff]
  %v520 = vld [vmem:[#allocation2 + $0x10] sm:$0xff]
  %v521 = vld [vmem:[#allocation2 + $0x18] sm:$0xff]
  %v522 = vld [vmem:[#allocation2 + $0x20] sm:$0xff]
  %v523 = vld [vmem:[#allocation2 + $0x28] sm:$0xff]
  %v524 = vld [vmem:[#allocation2 + $0x30] sm:$0xff]
  %v525 = vld [vmem:[#allocation2 + $0x38] sm:$0xff]
  %v526 = vpack.c.bf16 %v519, %v518
  %v527 = vpack.c.bf16 %v521, %v520
  %v528 = vpack.c.bf16 %v523, %v522
  %v529 = vpack.c.bf16 %v525, %v524
  %s530 = scalar_lea.vmem %s1, 16
  %v531 = vld [vmem:[%s530] sm:$0xf]
  %v532 = vld [vmem:[%s530 + $0x4] sm:$0xf]
  %v533 = vld [vmem:[%s530 + $0x8] sm:$0xf]
  %v534 = vld [vmem:[%s530 + $0xc] sm:$0xf]
  %s535 = scalar_lea.vmem %s3, 1
  %v536 = vld [vmem:[%s535] sm:$0x1]
  %v538 = vperm.slane %v536, 0
  %v544 = vunpack.c.l.b16 %v531
  %v545 = vunpack.c.l.b16 %v532
  %v546 = vunpack.c.l.b16 %v533
  %v547 = vunpack.c.l.b16 %v534
  %v548 = vpack.c.b16 %v545, %v544
  %v549 = vpack.c.b16 %v547, %v546
  %v553 = vsel %vm80, %v526, 0
  %v556 = vsel %vm80, %v527, 0
  %v559 = vsel %vm80, %v528, 0
  %v562 = vsel %vm80, %v529, 0
  %564 = vmatpush.bf16.msra.mxu0 0
  %565 = vmatpush.bf16.msra.mxu0 0
  %566 = vmatpush.bf16.msra.mxu0 0
  %567 = vmatpush.bf16.msra.mxu0 0
  %568 = vmatpush.bf16.msra.mxu0 0
  %569 = vmatpush.bf16.msra.mxu0 0
  %570 = vmatpush.bf16.msra.mxu0 %v549
  %571 = vmatpush.bf16.msra.mxu0 %v548
  %572 = vmatmul.bf16.gmra.mxu0 %v553
  %v573 = vpop.f32.mrf.mxu0
  %v574 = vadd.f32 %v538, %v573
  %v575 = vpop.f32.mrf.mxu0
  %v576 = vadd.f32 %v538, %v575
  %577 = vmatmul.bf16.gmra.mxu0 %v556
  %v578 = vpop.f32.mrf.mxu0
  %v579 = vadd.f32 %v538, %v578
  %v580 = vpop.f32.mrf.mxu0
  %v581 = vadd.f32 %v538, %v580
  %582 = vmatmul.bf16.gmra.mxu0 %v559
  %v583 = vpop.f32.mrf.mxu0
  %v584 = vadd.f32 %v538, %v583
  %v585 = vpop.f32.mrf.mxu0
  %v586 = vadd.f32 %v538, %v585
  %587 = vmatmul.bf16.gmra.mxu0 %v562
  %v588 = vpop.f32.mrf.mxu0
  %v589 = vadd.f32 %v538, %v588
  %v590 = vpop.f32.mrf.mxu0
  %v591 = vadd.f32 %v538, %v590
  %592 = vdwg.mxu0
  %s593 = scalar_lea.vmem %s2, 16
  %v594 = vld [vmem:[%s593] sm:$0xf]
  %v595 = vld [vmem:[%s593 + $0x4] sm:$0xf]
  %v596 = vld [vmem:[%s593 + $0x8] sm:$0xf]
  %v597 = vld [vmem:[%s593 + $0xc] sm:$0xf]
  %v602 = vunpack.c.l.b16 %v594
  %v603 = vunpack.c.l.b16 %v595
  %v604 = vunpack.c.l.b16 %v596
  %v605 = vunpack.c.l.b16 %v597
  %v606 = vpack.c.b16 %v603, %v602
  %v607 = vpack.c.b16 %v605, %v604
  %610 = vmatpush.bf16.msra.mxu0 0
  %611 = vmatpush.bf16.msra.mxu0 0
  %612 = vmatpush.bf16.msra.mxu0 0
  %613 = vmatpush.bf16.msra.mxu0 0
  %614 = vmatpush.bf16.msra.mxu0 0
  %615 = vmatpush.bf16.msra.mxu0 0
  %616 = vmatpush.bf16.msra.mxu0 %v607
  %617 = vmatpush.bf16.msra.mxu0 %v606
  %618 = vmatmul.bf16.gmra.mxu0 %v139
  %v619 = vpop.f32.mrf.mxu0
  %v620 = vadd.f32 0.0, %v619
  %v621 = vpop.f32.mrf.mxu0
  %622 = vdwg.mxu0
  %v623 = vadd.f32 %v574, %v620
  %v624 = vmul.f32 %v623, %v31
  %v625 = vtanh.pop %v624
  %v626 = vmul.f32 %v625, 0.5
  %v627 = vadd.f32 %v626, 0.5
  %v628 = vsel %vm30, %v625, %v627
  %v629 = vmul.f32 %v628, 0.0
  %631 = vrot.lane.b32.xlu0 %v628, 64
  %v632 = vpop.permute.xlu0 %631
  %v634 = vmul.f32 %v628, %v632
  %636 = vrot.lane.b32.xlu0 %v634, 32
  %v637 = vpop.permute.xlu0 %636
  %v639 = vadd.f32 %v629, %v637
  %v640 = vtanh.pop %v639
  %642 = vrot.lane.b32.xlu0 %v640, 64
  %v643 = vpop.permute.xlu0 %642
  %v645 = vmul.f32 %v628, %v643
  %v646 = vpack.c.bf16 %v645, %v645
  %648 = vrot.lane.b32.xlu0 %v646, 32
  %v649 = vpop.permute.xlu0 %648
  %v651 = vsel %vm80, %v649, 0
  %653 = vmatpush.bf16.msra.mxu0 0
  %654 = vmatpush.bf16.msra.mxu0 0
  %655 = vmatpush.bf16.msra.mxu0 0
  %656 = vmatpush.bf16.msra.mxu0 0
  %657 = vmatpush.bf16.msra.mxu0 0
  %658 = vmatpush.bf16.msra.mxu0 0
  %659 = vmatpush.bf16.msra.mxu0 %v607
  %660 = vmatpush.bf16.msra.mxu0 %v606
  %661 = vmatmul.bf16.gmra.mxu0 %v651
  %v662 = vpop.f32.mrf.mxu0
  %v663 = vadd.f32 0.0, %v662
  %v664 = vpop.f32.mrf.mxu0
  %665 = vdwg.mxu0
  %v666 = vadd.f32 %v576, %v663
  %v667 = vmul.f32 %v666, %v31
  %v668 = vtanh.pop %v667
  %v669 = vmul.f32 %v668, 0.5
  %v670 = vadd.f32 %v669, 0.5
  %v671 = vsel %vm30, %v668, %v670
  %v672 = vmul.f32 %v671, %v639
  %674 = vrot.lane.b32.xlu0 %v671, 64
  %v675 = vpop.permute.xlu0 %674
  %v677 = vmul.f32 %v671, %v675
  %679 = vrot.lane.b32.xlu0 %v677, 32
  %v680 = vpop.permute.xlu0 %679
  %v682 = vadd.f32 %v672, %v680
  %v683 = vtanh.pop %v682
  %685 = vrot.lane.b32.xlu0 %v683, 64
  %v686 = vpop.permute.xlu0 %685
  %v688 = vmul.f32 %v671, %v686
  %v689 = vpack.c.bf16 %v688, %v688
  %691 = vrot.lane.b32.xlu0 %v689, 32
  %v692 = vpop.permute.xlu0 %691
  %v694 = vsel %vm80, %v692, 0
  %696 = vmatpush.bf16.msra.mxu0 0
  %697 = vmatpush.bf16.msra.mxu0 0
  %698 = vmatpush.bf16.msra.mxu0 0
  %699 = vmatpush.bf16.msra.mxu0 0
  %700 = vmatpush.bf16.msra.mxu0 0
  %701 = vmatpush.bf16.msra.mxu0 0
  %702 = vmatpush.bf16.msra.mxu0 %v607
  %703 = vmatpush.bf16.msra.mxu0 %v606
  %704 = vmatmul.bf16.gmra.mxu0 %v694
  %v705 = vpop.f32.mrf.mxu0
  %v706 = vadd.f32 0.0, %v705
  %v707 = vpop.f32.mrf.mxu0
  %708 = vdwg.mxu0
  %v709 = vadd.f32 %v579, %v706
  %v710 = vmul.f32 %v709, %v31
  %v711 = vtanh.pop %v710
  %v712 = vmul.f32 %v711, 0.5
  %v713 = vadd.f32 %v712, 0.5
  %v714 = vsel %vm30, %v711, %v713
  %v715 = vmul.f32 %v714, %v682
  %717 = vrot.lane.b32.xlu0 %v714, 64
  %v718 = vpop.permute.xlu0 %717
  %v720 = vmul.f32 %v714, %v718
  %722 = vrot.lane.b32.xlu0 %v720, 32
  %v723 = vpop.permute.xlu0 %722
  %v725 = vadd.f32 %v715, %v723
  %v726 = vtanh.pop %v725
  %728 = vrot.lane.b32.xlu0 %v726, 64
  %v729 = vpop.permute.xlu0 %728
  %v731 = vmul.f32 %v714, %v729
  %v732 = vpack.c.bf16 %v731, %v731
  %734 = vrot.lane.b32.xlu0 %v732, 32
  %v735 = vpop.permute.xlu0 %734
  %v737 = vsel %vm80, %v735, 0
  %739 = vmatpush.bf16.msra.mxu0 0
  %740 = vmatpush.bf16.msra.mxu0 0
  %741 = vmatpush.bf16.msra.mxu0 0
  %742 = vmatpush.bf16.msra.mxu0 0
  %743 = vmatpush.bf16.msra.mxu0 0
  %744 = vmatpush.bf16.msra.mxu0 0
  %745 = vmatpush.bf16.msra.mxu0 %v607
  %746 = vmatpush.bf16.msra.mxu0 %v606
  %747 = vmatmul.bf16.gmra.mxu0 %v737
  %v748 = vpop.f32.mrf.mxu0
  %v749 = vadd.f32 0.0, %v748
  %v750 = vpop.f32.mrf.mxu0
  %751 = vdwg.mxu0
  %v752 = vadd.f32 %v581, %v749
  %v753 = vmul.f32 %v752, %v31
  %v754 = vtanh.pop %v753
  %v755 = vmul.f32 %v754, 0.5
  %v756 = vadd.f32 %v755, 0.5
  %v757 = vsel %vm30, %v754, %v756
  %v758 = vmul.f32 %v757, %v725
  %760 = vrot.lane.b32.xlu0 %v757, 64
  %v761 = vpop.permute.xlu0 %760
  %v763 = vmul.f32 %v757, %v761
  %765 = vrot.lane.b32.xlu0 %v763, 32
  %v766 = vpop.permute.xlu0 %765
  %v768 = vadd.f32 %v758, %v766
  %v769 = vtanh.pop %v768
  %771 = vrot.lane.b32.xlu0 %v769, 64
  %v772 = vpop.permute.xlu0 %771
  %v774 = vmul.f32 %v757, %v772
  %v775 = vpack.c.bf16 %v774, %v774
  %777 = vrot.lane.b32.xlu0 %v775, 32
  %v778 = vpop.permute.xlu0 %777
  %v780 = vsel %vm80, %v778, 0
  %782 = vmatpush.bf16.msra.mxu0 0
  %783 = vmatpush.bf16.msra.mxu0 0
  %784 = vmatpush.bf16.msra.mxu0 0
  %785 = vmatpush.bf16.msra.mxu0 0
  %786 = vmatpush.bf16.msra.mxu0 0
  %787 = vmatpush.bf16.msra.mxu0 0
  %788 = vmatpush.bf16.msra.mxu0 %v607
  %789 = vmatpush.bf16.msra.mxu0 %v606
  %790 = vmatmul.bf16.gmra.mxu0 %v780
  %v791 = vpop.f32.mrf.mxu0
  %v792 = vadd.f32 0.0, %v791
  %v793 = vpop.f32.mrf.mxu0
  %794 = vdwg.mxu0
  %v795 = vadd.f32 %v584, %v792
  %v796 = vmul.f32 %v795, %v31
  %v797 = vtanh.pop %v796
  %v798 = vmul.f32 %v797, 0.5
  %v799 = vadd.f32 %v798, 0.5
  %v800 = vsel %vm30, %v797, %v799
  %v801 = vmul.f32 %v800, %v768
  %803 = vrot.lane.b32.xlu0 %v800, 64
  %v804 = vpop.permute.xlu0 %803
  %v806 = vmul.f32 %v800, %v804
  %808 = vrot.lane.b32.xlu0 %v806, 32
  %v809 = vpop.permute.xlu0 %808
  %v811 = vadd.f32 %v801, %v809
  %v812 = vtanh.pop %v811
  %814 = vrot.lane.b32.xlu0 %v812, 64
  %v815 = vpop.permute.xlu0 %814
  %v817 = vmul.f32 %v800, %v815
  %v818 = vpack.c.bf16 %v817, %v817
  %820 = vrot.lane.b32.xlu0 %v818, 32
  %v821 = vpop.permute.xlu0 %820
  %v823 = vsel %vm80, %v821, 0
  %825 = vmatpush.bf16.msra.mxu0 0
  %826 = vmatpush.bf16.msra.mxu0 0
  %827 = vmatpush.bf16.msra.mxu0 0
  %828 = vmatpush.bf16.msra.mxu0 0
  %829 = vmatpush.bf16.msra.mxu0 0
  %830 = vmatpush.bf16.msra.mxu0 0
  %831 = vmatpush.bf16.msra.mxu0 %v607
  %832 = vmatpush.bf16.msra.mxu0 %v606
  %833 = vmatmul.bf16.gmra.mxu0 %v823
  %v834 = vpop.f32.mrf.mxu0
  %v835 = vadd.f32 0.0, %v834
  %v836 = vpop.f32.mrf.mxu0
  %837 = vdwg.mxu0
  %v838 = vadd.f32 %v586, %v835
  %v839 = vmul.f32 %v838, %v31
  %v840 = vtanh.pop %v839
  %v841 = vmul.f32 %v840, 0.5
  %v842 = vadd.f32 %v841, 0.5
  %v843 = vsel %vm30, %v840, %v842
  %v844 = vmul.f32 %v843, %v811
  %846 = vrot.lane.b32.xlu0 %v843, 64
  %v847 = vpop.permute.xlu0 %846
  %v849 = vmul.f32 %v843, %v847
  %851 = vrot.lane.b32.xlu0 %v849, 32
  %v852 = vpop.permute.xlu0 %851
  %v854 = vadd.f32 %v844, %v852
  %v855 = vtanh.pop %v854
  %857 = vrot.lane.b32.xlu0 %v855, 64
  %v858 = vpop.permute.xlu0 %857
  %v860 = vmul.f32 %v843, %v858
  %v861 = vpack.c.bf16 %v860, %v860
  %863 = vrot.lane.b32.xlu0 %v861, 32
  %v864 = vpop.permute.xlu0 %863
  %v866 = vsel %vm80, %v864, 0
  %868 = vmatpush.bf16.msra.mxu0 0
  %869 = vmatpush.bf16.msra.mxu0 0
  %870 = vmatpush.bf16.msra.mxu0 0
  %871 = vmatpush.bf16.msra.mxu0 0
  %872 = vmatpush.bf16.msra.mxu0 0
  %873 = vmatpush.bf16.msra.mxu0 0
  %874 = vmatpush.bf16.msra.mxu0 %v607
  %875 = vmatpush.bf16.msra.mxu0 %v606
  %876 = vmatmul.bf16.gmra.mxu0 %v866
  %v877 = vpop.f32.mrf.mxu0
  %v878 = vadd.f32 0.0, %v877
  %v879 = vpop.f32.mrf.mxu0
  %880 = vdwg.mxu0
  %v881 = vadd.f32 %v589, %v878
  %v882 = vmul.f32 %v881, %v31
  %v883 = vtanh.pop %v882
  %v884 = vmul.f32 %v883, 0.5
  %v885 = vadd.f32 %v884, 0.5
  %v886 = vsel %vm30, %v883, %v885
  %v887 = vmul.f32 %v886, %v854
  %889 = vrot.lane.b32.xlu0 %v886, 64
  %v890 = vpop.permute.xlu0 %889
  %v892 = vmul.f32 %v886, %v890
  %894 = vrot.lane.b32.xlu0 %v892, 32
  %v895 = vpop.permute.xlu0 %894
  %v897 = vadd.f32 %v887, %v895
  %v898 = vtanh.pop %v897
  %900 = vrot.lane.b32.xlu0 %v898, 64
  %v901 = vpop.permute.xlu0 %900
  %v903 = vmul.f32 %v886, %v901
  %v904 = vpack.c.bf16 %v903, %v903
  %906 = vrot.lane.b32.xlu0 %v904, 32
  %v907 = vpop.permute.xlu0 %906
  %v909 = vsel %vm80, %v907, 0
  %911 = vmatpush.bf16.msra.mxu0 0
  %912 = vmatpush.bf16.msra.mxu0 0
  %913 = vmatpush.bf16.msra.mxu0 0
  %914 = vmatpush.bf16.msra.mxu0 0
  %915 = vmatpush.bf16.msra.mxu0 0
  %916 = vmatpush.bf16.msra.mxu0 0
  %917 = vmatpush.bf16.msra.mxu0 %v607
  %918 = vmatpush.bf16.msra.mxu0 %v606
  %919 = vmatmul.bf16.gmra.mxu0 %v909
  %v920 = vpop.f32.mrf.mxu0
  %v921 = vadd.f32 0.0, %v920
  %v922 = vpop.f32.mrf.mxu0
  %923 = vdwg.mxu0
  %v924 = vadd.f32 %v591, %v921
  %v925 = vmul.f32 %v924, %v31
  %v926 = vtanh.pop %v925
  %v927 = vmul.f32 %v926, 0.5
  %v928 = vadd.f32 %v927, 0.5
  %v929 = vsel %vm30, %v926, %v928
  %v930 = vmul.f32 %v929, %v897
  %932 = vrot.lane.b32.xlu0 %v929, 64
  %v933 = vpop.permute.xlu0 %932
  %v935 = vmul.f32 %v929, %v933
  %937 = vrot.lane.b32.xlu0 %v935, 32
  %v938 = vpop.permute.xlu0 %937
  %v940 = vadd.f32 %v930, %v938
  %v941 = vtanh.pop %v940
  %943 = vrot.lane.b32.xlu0 %v941, 64
  %v944 = vpop.permute.xlu0 %943
  %v946 = vmul.f32 %v929, %v944
  %v947 = vld [vmem:[%s4] sm:$0x1]
  %v949 = vperm.slane %v947, 0
  %950 = vrot.lane.b32.xlu0 %v949, 96
  %v951 = vpop.permute.xlu0 %950
  %v953 = vmul.f32 %v946, %v951
  %955 = vrot.lane.b32.xlu0 %v953, 32
  %v956 = vpop.permute.xlu0 %955
  %v958 = vsel %vm80, %v956, 0.0
  %959 = vadd.xlane.f32.xlu0 %v958
  %v960 = vpop.xlane.xlu0 %959
  %v961 = vld [vmem:[#allocation3] sm:$0x1]
  %v963 = vperm.slane %v961, 0
  %v965 = vadd.f32 %v960, %v963
  %967 = vset.pattern.permute.xlu0 0
  %968 = vperm.xlu0 %967, %v965
  %v969 = vpop.permute.xlu0 %968
  %971 = vst [vmem:[%s6] sm:$0xff] %v969
  // Predicated region
  $region26: #{value_predictor_forward.1} parent=0 // pred_check
    _
  $region27: #{value_predictor_forward.1} parent=0 // pred_check_branch
    %973 = sbr.rel (0) target = $region29
  $region28: #{value_predictor_forward.1} parent=0 // pred_region
    _
  $region29: #{value_predictor_forward.1} parent=0 // pred_fallthru
    _
  // Predicated region
  $region30: #{value_predictor_forward.1} parent=0 // pred_check
    _
  $region31: #{value_predictor_forward.1} parent=0 // pred_check_branch
    %975 = sbr.rel (0) target = $region33
  $region32: #{value_predictor_forward.1} parent=0 // pred_region
    _
  $region33: #{value_predictor_forward.1} parent=0 // pred_fallthru
    _

</llo_original>
